<compile_context>
chip_gen: v6e
topology: v6e:2x2x1
jax: 0.10.0
libtpu: 0.0.40
codegen_flags: <defaults>
</compile_context>

<pallas_src>
import math
import jax
import jax.numpy as jnp
from jax.experimental import pallas as pl
from jax.experimental.pallas import tpu as pltpu

# ---- synthetic model config (small, consistent with a text encoder forward) ----
B = 2            # batch
S = 8            # sequence length
H = 64           # hidden size
NH = 2           # attention heads
DH = H // NH     # head dim
FFN = 128        # FFN intermediate size
VOCAB = 64       # vocabulary size
LAYERS = 2       # encoder layers
EPS = 1e-12      # BERT/DistilBERT layernorm eps
TARGET_TOKEN_IDX = 0
NEG = -1e9       # additive mask value (applied in f32)


def _ln(y, g, b):
    mu = jnp.mean(y, axis=-1, keepdims=True)
    var = jnp.mean((y - mu) ** 2, axis=-1, keepdims=True)
    return (y - mu) * jax.lax.rsqrt(var + EPS) * g + b


def _gelu_erf(x):
    # Exact (erf-based) GELU as used by HF DistilBERT.  erf evaluated with the
    # Abramowitz & Stegun 7.1.26 polynomial (|abs err| < 1.5e-7): only exp (EUP slot)
    # plus basic VPU ops, so it lowers cleanly in Mosaic and is essentially free.
    z = x * 0.7071067811865476                      # x / sqrt(2)
    az = jnp.abs(z)
    t = 1.0 / (1.0 + 0.3275911 * az)
    poly = ((((1.061405429 * t - 1.453152027) * t + 1.421413741) * t
             - 0.284496736) * t + 0.254829592) * t
    erf_abs = 1.0 - poly * jnp.exp(-az * az)
    erf = jnp.where(z >= 0, erf_abs, -erf_abs)
    return 0.5 * x * (1.0 + erf)


# --------------------------- per-sample fused forward kernel ---------------------------
def text_encoder_kernel(ids_ref, mask_ref,
                        wemb_ref, pemb_ref, eg_ref, eb_ref,
                        wqkv_ref, bqkv_ref, wo_ref, bo_ref,
                        g1_ref, be1_ref, w1_ref, b1_ref,
                        w2_ref, b2_ref, g2_ref, be2_ref,
                        out_ref, ctx_ref):
    f32 = jnp.float32
    bf16 = jnp.bfloat16

    # ---- embedding lookup as a one-hot matmul (keeps the gather on the MXU) ----
    ids = ids_ref[0]                                                   # (S, 1) int32
    vocab_iota = jax.lax.broadcasted_iota(jnp.int32, (S, VOCAB), 1)
    onehot = (vocab_iota == ids).astype(bf16)                          # (S, VOCAB)
    x = jnp.dot(onehot, wemb_ref[...], preferred_element_type=f32)     # (S, H) f32
    x = x + pemb_ref[...]                                              # per-sample: no tiling
    x = _ln(x, eg_ref[...], eb_ref[...])

    # ---- additive key-padding bias for this sample (no block-diagonal needed) ----
    bias = jnp.where(mask_ref[0] > 0.5, 0.0, NEG).astype(f32)          # (1, S)

    scale = 1.0 / math.sqrt(DH)

    # ---- encoder layers (weights VMEM-resident, statically unrolled) ----
    for li in range(LAYERS):
        xb = x.astype(bf16)
        # fused QKV projection: one (S, H) x (H, 3H) matmul
        qkv = jnp.dot(xb, wqkv_ref[li], preferred_element_type=f32) + bqkv_ref[li]
        qkvb = qkv.astype(bf16)                                        # single full-width cast

        for h in range(NH):                                            # static, NH = 2
            qh = qkvb[:, h * DH:(h + 1) * DH]
            kh = qkvb[:, H + h * DH:H + (h + 1) * DH]
            vh = qkvb[:, 2 * H + h * DH:2 * H + (h + 1) * DH]
            # contract last dims of q and k directly -> no kh.T relayout through the XLU
            s = jax.lax.dot_general(qh, kh, (((1,), (1,)), ((), ())),
                                    preferred_element_type=f32)        # (S, S)
            s = s * scale + bias
            s = s - jnp.max(s, axis=-1, keepdims=True)
            p = jnp.exp(s)
            p = p * pl.reciprocal(jnp.sum(p, axis=-1, keepdims=True), approx=True)
            # write each head's context into the VMEM scratch (no lane-dim concatenate)
            ctx_ref[:, h * DH:(h + 1) * DH] = jnp.dot(
                p.astype(bf16), vh, preferred_element_type=f32)

        # single output projection for all heads
        attn = jnp.dot(ctx_ref[...].astype(bf16), wo_ref[li],
                       preferred_element_type=f32) + bo_ref[li]
        h1 = _ln(x + attn, g1_ref[li], be1_ref[li])                    # post-norm

        ff = jnp.dot(h1.astype(bf16), w1_ref[li], preferred_element_type=f32) + b1_ref[li]
        ff = _gelu_erf(ff)                                             # exact erf-GELU
        ff = jnp.dot(ff.astype(bf16), w2_ref[li], preferred_element_type=f32) + b2_ref[li]
        x = _ln(h1 + ff, g2_ref[li], be2_ref[li])

    # ---- only this sample's CLS (target_token_idx) row is written back ----
    out_ref[...] = x[TARGET_TOKEN_IDX:TARGET_TOKEN_IDX + 1, :].reshape(1, 1, H)


# ------------------------------ parameter init ------------------------------
def init_params(key):
    def nrm(k, shape, dtype=jnp.bfloat16):
        return (0.02 * jax.random.normal(k, shape, dtype=jnp.float32)).astype(dtype)

    keys = jax.random.split(key, 2 + 4 * LAYERS)
    wqkv, wo, w1, w2 = [], [], [], []
    for li in range(LAYERS):
        k0, k1, k2, k3 = keys[2 + 4 * li: 2 + 4 * li + 4]
        wqkv.append(nrm(k0, (H, 3 * H)))
        wo.append(nrm(k1, (H, H)))
        w1.append(nrm(k2, (H, FFN)))
        w2.append(nrm(k3, (FFN, H)))

    zeros = lambda shape: jnp.zeros(shape, jnp.float32)
    ones = lambda shape: jnp.ones(shape, jnp.float32)
    return {
        # bf16 weight matrices (MXU operands), f32 biases / LN params
        "word_emb": nrm(keys[0], (VOCAB, H)),
        "pos_emb": nrm(keys[1], (S, H), jnp.float32),
        "emb_ln_g": ones((1, H)), "emb_ln_b": zeros((1, H)),
        "wqkv": jnp.stack(wqkv), "bqkv": zeros((LAYERS, 1, 3 * H)),
        "wo": jnp.stack(wo), "bo": zeros((LAYERS, 1, H)),
        "g1": ones((LAYERS, 1, H)), "be1": zeros((LAYERS, 1, H)),
        "w1": jnp.stack(w1), "b1": zeros((LAYERS, 1, FFN)),
        "w2": jnp.stack(w2), "b2": zeros((LAYERS, 1, H)),
        "g2": ones((LAYERS, 1, H)), "be2": zeros((LAYERS, 1, H)),
    }


# --------------------------------- forward ---------------------------------
def text_encoder_forward(input_ids, attention_mask, params):
    ids3 = input_ids.astype(jnp.int32).reshape(B, S, 1)                # (B, S, 1)
    mask3 = attention_mask.astype(jnp.float32).reshape(B, 1, S)        # (B, 1, S)

    # full-array block with constant index map (weights fetched once, VMEM-resident)
    def const_spec(shape):
        return pl.BlockSpec(shape, lambda b, _n=len(shape): (0,) * _n)

    grid_spec = pltpu.PrefetchScalarGridSpec(
        num_scalar_prefetch=0,
        grid=(B,),
        in_specs=[
            pl.BlockSpec((1, S, 1), lambda b: (b, 0, 0)),              # ids  (per sample)
            pl.BlockSpec((1, 1, S), lambda b: (b, 0, 0)),              # mask (per sample)
            const_spec((VOCAB, H)), const_spec((S, H)),
            const_spec((1, H)), const_spec((1, H)),
            const_spec((LAYERS, H, 3 * H)), const_spec((LAYERS, 1, 3 * H)),
            const_spec((LAYERS, H, H)), const_spec((LAYERS, 1, H)),
            const_spec((LAYERS, 1, H)), const_spec((LAYERS, 1, H)),
            const_spec((LAYERS, H, FFN)), const_spec((LAYERS, 1, FFN)),
            const_spec((LAYERS, FFN, H)), const_spec((LAYERS, 1, H)),
            const_spec((LAYERS, 1, H)), const_spec((LAYERS, 1, H)),
        ],
        out_specs=pl.BlockSpec((1, 1, H), lambda b: (b, 0, 0)),
        scratch_shapes=[pltpu.VMEM((S, H), jnp.float32)],              # per-head context
    )

    out3 = pl.pallas_call(
        text_encoder_kernel,
        out_shape=jax.ShapeDtypeStruct((B, 1, H), jnp.float32),
        grid_spec=grid_spec,
        compiler_params=pltpu.CompilerParams(
            dimension_semantics=("parallel",)),                        # 2 TCs on v7x
    )(ids3, mask3,
      params["word_emb"], params["pos_emb"], params["emb_ln_g"], params["emb_ln_b"],
      params["wqkv"], params["bqkv"], params["wo"], params["bo"],
      params["g1"], params["be1"], params["w1"], params["b1"],
      params["w2"], params["b2"], params["g2"], params["be2"])
    return out3.reshape(B, H)


if __name__ == "__main__":
    key = jax.random.PRNGKey(0)
    k_param, k_ids = jax.random.split(key)
    params = init_params(k_param)

    input_ids = jax.random.randint(k_ids, (B, S), 0, VOCAB, dtype=jnp.int32)
    attention_mask = jnp.array([[1, 1, 1, 1, 1, 1, 1, 1],
                                [1, 1, 1, 1, 1, 0, 0, 0]], dtype=jnp.int32)

    fwd = jax.jit(text_encoder_forward)
    out = fwd(input_ids, attention_mask, params)
    jax.block_until_ready(out)
    assert out.shape == (B, H) and out.dtype == jnp.float32
    assert bool(jnp.all(jnp.isfinite(out)))
    print("KERNEL_OK")
</pallas_src>

<mosaic_0001>
module attributes {stable_mosaic.version = 11 : i64} {
  func.func @text_encoder_kernel(%arg0: i32, %arg1: memref<1x8x1xi32, #tpu.memory_space<vmem>>, %arg2: memref<1x1x8xf32, #tpu.memory_space<vmem>>, %arg3: memref<64x64xbf16, #tpu.memory_space<vmem>>, %arg4: memref<8x64xf32, #tpu.memory_space<vmem>>, %arg5: memref<1x64xf32, #tpu.memory_space<vmem>>, %arg6: memref<1x64xf32, #tpu.memory_space<vmem>>, %arg7: memref<2x64x192xbf16, #tpu.memory_space<vmem>>, %arg8: memref<2x1x192xf32, #tpu.memory_space<vmem>>, %arg9: memref<2x64x64xbf16, #tpu.memory_space<vmem>>, %arg10: memref<2x1x64xf32, #tpu.memory_space<vmem>>, %arg11: memref<2x1x64xf32, #tpu.memory_space<vmem>>, %arg12: memref<2x1x64xf32, #tpu.memory_space<vmem>>, %arg13: memref<2x64x128xbf16, #tpu.memory_space<vmem>>, %arg14: memref<2x1x128xf32, #tpu.memory_space<vmem>>, %arg15: memref<2x128x64xbf16, #tpu.memory_space<vmem>>, %arg16: memref<2x1x64xf32, #tpu.memory_space<vmem>>, %arg17: memref<2x1x64xf32, #tpu.memory_space<vmem>>, %arg18: memref<2x1x64xf32, #tpu.memory_space<vmem>>, %arg19: memref<1x1x64xf32, #tpu.memory_space<vmem>>, %arg20: memref<8x64xf32, #tpu.memory_space<vmem>>) attributes {dimension_semantics = [#tpu.dimension_semantics<parallel>], iteration_bounds = array<i64: 2>, scalar_prefetch = 0 : i64, scratch_operands = 1 : i64, tpu.core_type = #tpu.core_type<tc>, window_params = [{transform_indices = @transform_0, window_bounds = array<i64: 1, 8, 1>}, {transform_indices = @transform_1, window_bounds = array<i64: 1, 1, 8>}, {pipeline_mode = #tpu.pipeline_mode<synchronous>, transform_indices = @transform_2, window_bounds = array<i64: 64, 64>}, {pipeline_mode = #tpu.pipeline_mode<synchronous>, transform_indices = @transform_3, window_bounds = array<i64: 8, 64>}, {pipeline_mode = #tpu.pipeline_mode<synchronous>, transform_indices = @transform_4, window_bounds = array<i64: 1, 64>}, {pipeline_mode = #tpu.pipeline_mode<synchronous>, transform_indices = @transform_5, window_bounds = array<i64: 1, 64>}, {pipeline_mode = #tpu.pipeline_mode<synchronous>, transform_indices = @transform_6, window_bounds = array<i64: 2, 64, 192>}, {pipeline_mode = #tpu.pipeline_mode<synchronous>, transform_indices = @transform_7, window_bounds = array<i64: 2, 1, 192>}, {pipeline_mode = #tpu.pipeline_mode<synchronous>, transform_indices = @transform_8, window_bounds = array<i64: 2, 64, 64>}, {pipeline_mode = #tpu.pipeline_mode<synchronous>, transform_indices = @transform_9, window_bounds = array<i64: 2, 1, 64>}, {pipeline_mode = #tpu.pipeline_mode<synchronous>, transform_indices = @transform_10, window_bounds = array<i64: 2, 1, 64>}, {pipeline_mode = #tpu.pipeline_mode<synchronous>, transform_indices = @transform_11, window_bounds = array<i64: 2, 1, 64>}, {pipeline_mode = #tpu.pipeline_mode<synchronous>, transform_indices = @transform_12, window_bounds = array<i64: 2, 64, 128>}, {pipeline_mode = #tpu.pipeline_mode<synchronous>, transform_indices = @transform_13, window_bounds = array<i64: 2, 1, 128>}, {pipeline_mode = #tpu.pipeline_mode<synchronous>, transform_indices = @transform_14, window_bounds = array<i64: 2, 128, 64>}, {pipeline_mode = #tpu.pipeline_mode<synchronous>, transform_indices = @transform_15, window_bounds = array<i64: 2, 1, 64>}, {pipeline_mode = #tpu.pipeline_mode<synchronous>, transform_indices = @transform_16, window_bounds = array<i64: 2, 1, 64>}, {pipeline_mode = #tpu.pipeline_mode<synchronous>, transform_indices = @transform_17, window_bounds = array<i64: 2, 1, 64>}, {transform_indices = @transform_18, window_bounds = array<i64: 1, 1, 64>}]} {
    %c0 = arith.constant 0 : index
    %c0_0 = arith.constant 0 : index
    %c0_1 = arith.constant 0 : index
    %0 = vector.load %arg1[%c0, %c0_0, %c0_1] : memref<1x8x1xi32, #tpu.memory_space<vmem>>, vector<1x8x1xi32>
    %1 = vector.shape_cast %0 : vector<1x8x1xi32> to vector<8x1xi32>
    %2 = tpu.iota {dimensions = array<i32: 1>} : vector<8x64xi32>
    %3 = vector.broadcast %1 : vector<8x1xi32> to vector<8x64xi32>
    %4 = arith.cmpi eq, %2, %3 : vector<8x64xi32>
    %5 = arith.extui %4 : vector<8x64xi1> to vector<8x64xi32>
    %6 = arith.sitofp %5 : vector<8x64xi32> to vector<8x64xf32>
    %7 = arith.truncf %6 : vector<8x64xf32> to vector<8x64xbf16>
    %c0_2 = arith.constant 0 : index
    %c0_3 = arith.constant 0 : index
    %8 = vector.load %arg3[%c0_2, %c0_3] : memref<64x64xbf16, #tpu.memory_space<vmem>>, vector<64x64xbf16>
    %cst = arith.constant dense<0.000000e+00> : vector<8x64xf32>
    %9 = tpu.matmul %7, %8, %cst {dimension_numbers = #tpu.dot_dimension_numbers<[1], [0], [0], [1], [0, 0, 1, 1], [], []>} : vector<8x64xbf16>, vector<64x64xbf16>, vector<8x64xf32> -> vector<8x64xf32>
    %c0_4 = arith.constant 0 : index
    %c0_5 = arith.constant 0 : index
    %10 = vector.load %arg4[%c0_4, %c0_5] : memref<8x64xf32, #tpu.memory_space<vmem>>, vector<8x64xf32>
    %11 = arith.addf %9, %10 : vector<8x64xf32>
    %c0_6 = arith.constant 0 : index
    %c0_7 = arith.constant 0 : index
    %12 = vector.load %arg5[%c0_6, %c0_7] : memref<1x64xf32, #tpu.memory_space<vmem>>, vector<1x64xf32>
    %c0_8 = arith.constant 0 : index
    %c0_9 = arith.constant 0 : index
    %13 = vector.load %arg6[%c0_8, %c0_9] : memref<1x64xf32, #tpu.memory_space<vmem>>, vector<1x64xf32>
    %cst_10 = arith.constant dense<0.000000e+00> : vector<8xf32>
    %14 = vector.multi_reduction <add>, %11, %cst_10 [1] : vector<8x64xf32> to vector<8xf32>
    %15 = vector.shape_cast %14 : vector<8xf32> to vector<8x1xf32>
    %cst_11 = arith.constant 6.400000e+01 : f32
    %16 = vector.broadcast %cst_11 : f32 to vector<8x1xf32>
    %17 = arith.divf %15, %16 : vector<8x1xf32>
    %18 = vector.broadcast %17 : vector<8x1xf32> to vector<8x64xf32>
    %19 = arith.subf %11, %18 : vector<8x64xf32>
    %20 = arith.mulf %19, %19 : vector<8x64xf32>
    %cst_12 = arith.constant dense<0.000000e+00> : vector<8xf32>
    %21 = vector.multi_reduction <add>, %20, %cst_12 [1] : vector<8x64xf32> to vector<8xf32>
    %22 = vector.shape_cast %21 : vector<8xf32> to vector<8x1xf32>
    %cst_13 = arith.constant 6.400000e+01 : f32
    %23 = vector.broadcast %cst_13 : f32 to vector<8x1xf32>
    %24 = arith.divf %22, %23 : vector<8x1xf32>
    %25 = vector.broadcast %17 : vector<8x1xf32> to vector<8x64xf32>
    %26 = arith.subf %11, %25 : vector<8x64xf32>
    %cst_14 = arith.constant 9.99999996E-13 : f32
    %27 = vector.broadcast %cst_14 : f32 to vector<8x1xf32>
    %28 = arith.addf %24, %27 : vector<8x1xf32>
    %29 = math.rsqrt %28 : vector<8x1xf32>
    %30 = vector.broadcast %29 : vector<8x1xf32> to vector<8x64xf32>
    %31 = arith.mulf %26, %30 : vector<8x64xf32>
    %32 = vector.broadcast %12 : vector<1x64xf32> to vector<8x64xf32>
    %33 = arith.mulf %31, %32 : vector<8x64xf32>
    %34 = vector.broadcast %13 : vector<1x64xf32> to vector<8x64xf32>
    %35 = arith.addf %33, %34 : vector<8x64xf32>
    %c0_15 = arith.constant 0 : index
    %c0_16 = arith.constant 0 : index
    %c0_17 = arith.constant 0 : index
    %36 = vector.load %arg2[%c0_15, %c0_16, %c0_17] : memref<1x1x8xf32, #tpu.memory_space<vmem>>, vector<1x1x8xf32>
    %37 = vector.shape_cast %36 : vector<1x1x8xf32> to vector<1x8xf32>
    %cst_18 = arith.constant 5.000000e-01 : f32
    %38 = vector.broadcast %cst_18 : f32 to vector<1x8xf32>
    %39 = arith.cmpf ogt, %37, %38 : vector<1x8xf32>
    %cst_19 = arith.constant 0.000000e+00 : f32
    %cst_20 = arith.constant -1.000000e+09 : f32
    %40 = vector.broadcast %cst_19 : f32 to vector<1x8xf32>
    %41 = vector.broadcast %cst_20 : f32 to vector<1x8xf32>
    %42 = arith.select %39, %40, %41 : vector<1x8xi1>, vector<1x8xf32>
    %43 = arith.truncf %35 : vector<8x64xf32> to vector<8x64xbf16>
    %c0_21 = arith.constant 0 : index
    %c0_22 = arith.constant 0 : index
    %c0_23 = arith.constant 0 : index
    %44 = vector.load %arg7[%c0_21, %c0_22, %c0_23] : memref<2x64x192xbf16, #tpu.memory_space<vmem>>, vector<1x64x192xbf16>
    %45 = vector.shape_cast %44 : vector<1x64x192xbf16> to vector<64x192xbf16>
    %cst_24 = arith.constant dense<0.000000e+00> : vector<8x192xf32>
    %46 = tpu.matmul %43, %45, %cst_24 {dimension_numbers = #tpu.dot_dimension_numbers<[1], [0], [0], [1], [0, 0, 1, 1], [], []>} : vector<8x64xbf16>, vector<64x192xbf16>, vector<8x192xf32> -> vector<8x192xf32>
    %c0_25 = arith.constant 0 : index
    %c0_26 = arith.constant 0 : index
    %c0_27 = arith.constant 0 : index
    %47 = vector.load %arg8[%c0_25, %c0_26, %c0_27] : memref<2x1x192xf32, #tpu.memory_space<vmem>>, vector<1x1x192xf32>
    %48 = vector.shape_cast %47 : vector<1x1x192xf32> to vector<1x192xf32>
    %49 = vector.broadcast %48 : vector<1x192xf32> to vector<8x192xf32>
    %50 = arith.addf %46, %49 : vector<8x192xf32>
    %51 = arith.truncf %50 : vector<8x192xf32> to vector<8x192xbf16>
    %52 = vector.extract_strided_slice %51 {offsets = [0, 0], sizes = [8, 32], strides = [1, 1]} : vector<8x192xbf16> to vector<8x32xbf16>
    %53 = vector.extract_strided_slice %51 {offsets = [0, 64], sizes = [8, 32], strides = [1, 1]} : vector<8x192xbf16> to vector<8x32xbf16>
    %54 = vector.extract_strided_slice %51 {offsets = [0, 128], sizes = [8, 32], strides = [1, 1]} : vector<8x192xbf16> to vector<8x32xbf16>
    %cst_28 = arith.constant dense<0.000000e+00> : vector<8x8xf32>
    %55 = tpu.matmul %52, %53, %cst_28 {dimension_numbers = #tpu.dot_dimension_numbers<[1], [1], [0], [0], [0, 0, 1, 0], [], []>} : vector<8x32xbf16>, vector<8x32xbf16>, vector<8x8xf32> -> vector<8x8xf32>
    %cst_29 = arith.constant 0.176776692 : f32
    %56 = vector.broadcast %cst_29 : f32 to vector<8x8xf32>
    %57 = arith.mulf %55, %56 : vector<8x8xf32>
    %58 = vector.broadcast %42 : vector<1x8xf32> to vector<8x8xf32>
    %59 = arith.addf %57, %58 : vector<8x8xf32>
    %cst_30 = arith.constant dense<0xFF800000> : vector<8xf32>
    %60 = vector.multi_reduction <maximumf>, %59, %cst_30 [1] : vector<8x8xf32> to vector<8xf32>
    %61 = vector.shape_cast %60 : vector<8xf32> to vector<8x1xf32>
    %62 = vector.broadcast %61 : vector<8x1xf32> to vector<8x8xf32>
    %63 = arith.subf %59, %62 : vector<8x8xf32>
    %64 = math.exp %63 : vector<8x8xf32>
    %cst_31 = arith.constant dense<0.000000e+00> : vector<8xf32>
    %65 = vector.multi_reduction <add>, %64, %cst_31 [1] : vector<8x8xf32> to vector<8xf32>
    %66 = vector.shape_cast %65 : vector<8xf32> to vector<8x1xf32>
    %67 = tpu.reciprocal %66 {approx = true} : vector<8x1xf32> -> vector<8x1xf32>
    %68 = vector.broadcast %67 : vector<8x1xf32> to vector<8x8xf32>
    %69 = arith.mulf %64, %68 : vector<8x8xf32>
    %70 = arith.truncf %69 : vector<8x8xf32> to vector<8x8xbf16>
    %cst_32 = arith.constant dense<0.000000e+00> : vector<8x32xf32>
    %71 = tpu.matmul %70, %54, %cst_32 {dimension_numbers = #tpu.dot_dimension_numbers<[1], [0], [0], [1], [0, 0, 1, 1], [], []>} : vector<8x8xbf16>, vector<8x32xbf16>, vector<8x32xf32> -> vector<8x32xf32>
    %c0_33 = arith.constant 0 : index
    %c0_34 = arith.constant 0 : index
    %72 = vector.load %arg20[%c0_33, %c0_34] : memref<8x64xf32, #tpu.memory_space<vmem>>, vector<8x32xf32>
    tpu.vector_store %arg20[%c0_33, %c0_34], %71 {strides = array<i32>} : memref<8x64xf32, #tpu.memory_space<vmem>>, vector<8x32xf32>,
    %73 = vector.extract_strided_slice %51 {offsets = [0, 32], sizes = [8, 32], strides = [1, 1]} : vector<8x192xbf16> to vector<8x32xbf16>
    %74 = vector.extract_strided_slice %51 {offsets = [0, 96], sizes = [8, 32], strides = [1, 1]} : vector<8x192xbf16> to vector<8x32xbf16>
    %75 = vector.extract_strided_slice %51 {offsets = [0, 160], sizes = [8, 32], strides = [1, 1]} : vector<8x192xbf16> to vector<8x32xbf16>
    %cst_35 = arith.constant dense<0.000000e+00> : vector<8x8xf32>
    %76 = tpu.matmul %73, %74, %cst_35 {dimension_numbers = #tpu.dot_dimension_numbers<[1], [1], [0], [0], [0, 0, 1, 0], [], []>} : vector<8x32xbf16>, vector<8x32xbf16>, vector<8x8xf32> -> vector<8x8xf32>
    %cst_36 = arith.constant 0.176776692 : f32
    %77 = vector.broadcast %cst_36 : f32 to vector<8x8xf32>
    %78 = arith.mulf %76, %77 : vector<8x8xf32>
    %79 = vector.broadcast %42 : vector<1x8xf32> to vector<8x8xf32>
    %80 = arith.addf %78, %79 : vector<8x8xf32>
    %cst_37 = arith.constant dense<0xFF800000> : vector<8xf32>
    %81 = vector.multi_reduction <maximumf>, %80, %cst_37 [1] : vector<8x8xf32> to vector<8xf32>
    %82 = vector.shape_cast %81 : vector<8xf32> to vector<8x1xf32>
    %83 = vector.broadcast %82 : vector<8x1xf32> to vector<8x8xf32>
    %84 = arith.subf %80, %83 : vector<8x8xf32>
    %85 = math.exp %84 : vector<8x8xf32>
    %cst_38 = arith.constant dense<0.000000e+00> : vector<8xf32>
    %86 = vector.multi_reduction <add>, %85, %cst_38 [1] : vector<8x8xf32> to vector<8xf32>
    %87 = vector.shape_cast %86 : vector<8xf32> to vector<8x1xf32>
    %88 = tpu.reciprocal %87 {approx = true} : vector<8x1xf32> -> vector<8x1xf32>
    %89 = vector.broadcast %88 : vector<8x1xf32> to vector<8x8xf32>
    %90 = arith.mulf %85, %89 : vector<8x8xf32>
    %91 = arith.truncf %90 : vector<8x8xf32> to vector<8x8xbf16>
    %cst_39 = arith.constant dense<0.000000e+00> : vector<8x32xf32>
    %92 = tpu.matmul %91, %75, %cst_39 {dimension_numbers = #tpu.dot_dimension_numbers<[1], [0], [0], [1], [0, 0, 1, 1], [], []>} : vector<8x8xbf16>, vector<8x32xbf16>, vector<8x32xf32> -> vector<8x32xf32>
    %c0_40 = arith.constant 0 : index
    %c32 = arith.constant 32 : index
    %93 = vector.load %arg20[%c0_40, %c32] : memref<8x64xf32, #tpu.memory_space<vmem>>, vector<8x32xf32>
    tpu.vector_store %arg20[%c0_40, %c32], %92 {strides = array<i32>} : memref<8x64xf32, #tpu.memory_space<vmem>>, vector<8x32xf32>,
    %c0_41 = arith.constant 0 : index
    %c0_42 = arith.constant 0 : index
    %94 = vector.load %arg20[%c0_41, %c0_42] : memref<8x64xf32, #tpu.memory_space<vmem>>, vector<8x64xf32>
    %95 = arith.truncf %94 : vector<8x64xf32> to vector<8x64xbf16>
    %c0_43 = arith.constant 0 : index
    %c0_44 = arith.constant 0 : index
    %c0_45 = arith.constant 0 : index
    %96 = vector.load %arg9[%c0_43, %c0_44, %c0_45] : memref<2x64x64xbf16, #tpu.memory_space<vmem>>, vector<1x64x64xbf16>
    %97 = vector.shape_cast %96 : vector<1x64x64xbf16> to vector<64x64xbf16>
    %cst_46 = arith.constant dense<0.000000e+00> : vector<8x64xf32>
    %98 = tpu.matmul %95, %97, %cst_46 {dimension_numbers = #tpu.dot_dimension_numbers<[1], [0], [0], [1], [0, 0, 1, 1], [], []>} : vector<8x64xbf16>, vector<64x64xbf16>, vector<8x64xf32> -> vector<8x64xf32>
    %c0_47 = arith.constant 0 : index
    %c0_48 = arith.constant 0 : index
    %c0_49 = arith.constant 0 : index
    %99 = vector.load %arg10[%c0_47, %c0_48, %c0_49] : memref<2x1x64xf32, #tpu.memory_space<vmem>>, vector<1x1x64xf32>
    %100 = vector.shape_cast %99 : vector<1x1x64xf32> to vector<1x64xf32>
    %101 = vector.broadcast %100 : vector<1x64xf32> to vector<8x64xf32>
    %102 = arith.addf %98, %101 : vector<8x64xf32>
    %103 = arith.addf %35, %102 : vector<8x64xf32>
    %c0_50 = arith.constant 0 : index
    %c0_51 = arith.constant 0 : index
    %c0_52 = arith.constant 0 : index
    %104 = vector.load %arg11[%c0_50, %c0_51, %c0_52] : memref<2x1x64xf32, #tpu.memory_space<vmem>>, vector<1x1x64xf32>
    %105 = vector.shape_cast %104 : vector<1x1x64xf32> to vector<1x64xf32>
    %c0_53 = arith.constant 0 : index
    %c0_54 = arith.constant 0 : index
    %c0_55 = arith.constant 0 : index
    %106 = vector.load %arg12[%c0_53, %c0_54, %c0_55] : memref<2x1x64xf32, #tpu.memory_space<vmem>>, vector<1x1x64xf32>
    %107 = vector.shape_cast %106 : vector<1x1x64xf32> to vector<1x64xf32>
    %cst_56 = arith.constant dense<0.000000e+00> : vector<8xf32>
    %108 = vector.multi_reduction <add>, %103, %cst_56 [1] : vector<8x64xf32> to vector<8xf32>
    %109 = vector.shape_cast %108 : vector<8xf32> to vector<8x1xf32>
    %cst_57 = arith.constant 6.400000e+01 : f32
    %110 = vector.broadcast %cst_57 : f32 to vector<8x1xf32>
    %111 = arith.divf %109, %110 : vector<8x1xf32>
    %112 = vector.broadcast %111 : vector<8x1xf32> to vector<8x64xf32>
    %113 = arith.subf %103, %112 : vector<8x64xf32>
    %114 = arith.mulf %113, %113 : vector<8x64xf32>
    %cst_58 = arith.constant dense<0.000000e+00> : vector<8xf32>
    %115 = vector.multi_reduction <add>, %114, %cst_58 [1] : vector<8x64xf32> to vector<8xf32>
    %116 = vector.shape_cast %115 : vector<8xf32> to vector<8x1xf32>
    %cst_59 = arith.constant 6.400000e+01 : f32
    %117 = vector.broadcast %cst_59 : f32 to vector<8x1xf32>
    %118 = arith.divf %116, %117 : vector<8x1xf32>
    %119 = vector.broadcast %111 : vector<8x1xf32> to vector<8x64xf32>
    %120 = arith.subf %103, %119 : vector<8x64xf32>
    %cst_60 = arith.constant 9.99999996E-13 : f32
    %121 = vector.broadcast %cst_60 : f32 to vector<8x1xf32>
    %122 = arith.addf %118, %121 : vector<8x1xf32>
    %123 = math.rsqrt %122 : vector<8x1xf32>
    %124 = vector.broadcast %123 : vector<8x1xf32> to vector<8x64xf32>
    %125 = arith.mulf %120, %124 : vector<8x64xf32>
    %126 = vector.broadcast %105 : vector<1x64xf32> to vector<8x64xf32>
    %127 = arith.mulf %125, %126 : vector<8x64xf32>
    %128 = vector.broadcast %107 : vector<1x64xf32> to vector<8x64xf32>
    %129 = arith.addf %127, %128 : vector<8x64xf32>
    %130 = arith.truncf %129 : vector<8x64xf32> to vector<8x64xbf16>
    %c0_61 = arith.constant 0 : index
    %c0_62 = arith.constant 0 : index
    %c0_63 = arith.constant 0 : index
    %131 = vector.load %arg13[%c0_61, %c0_62, %c0_63] : memref<2x64x128xbf16, #tpu.memory_space<vmem>>, vector<1x64x128xbf16>
    %132 = vector.shape_cast %131 : vector<1x64x128xbf16> to vector<64x128xbf16>
    %cst_64 = arith.constant dense<0.000000e+00> : vector<8x128xf32>
    %133 = tpu.matmul %130, %132, %cst_64 {dimension_numbers = #tpu.dot_dimension_numbers<[1], [0], [0], [1], [0, 0, 1, 1], [], []>} : vector<8x64xbf16>, vector<64x128xbf16>, vector<8x128xf32> -> vector<8x128xf32>
    %c0_65 = arith.constant 0 : index
    %c0_66 = arith.constant 0 : index
    %c0_67 = arith.constant 0 : index
    %134 = vector.load %arg14[%c0_65, %c0_66, %c0_67] : memref<2x1x128xf32, #tpu.memory_space<vmem>>, vector<1x1x128xf32>
    %135 = vector.shape_cast %134 : vector<1x1x128xf32> to vector<1x128xf32>
    %136 = vector.broadcast %135 : vector<1x128xf32> to vector<8x128xf32>
    %137 = arith.addf %133, %136 : vector<8x128xf32>
    %cst_68 = arith.constant 0.707106769 : f32
    %138 = vector.broadcast %cst_68 : f32 to vector<8x128xf32>
    %139 = arith.mulf %137, %138 : vector<8x128xf32>
    %140 = math.absf %139 : vector<8x128xf32>
    %cst_69 = arith.constant 0.327591091 : f32
    %141 = vector.broadcast %cst_69 : f32 to vector<8x128xf32>
    %142 = arith.mulf %141, %140 : vector<8x128xf32>
    %cst_70 = arith.constant 1.000000e+00 : f32
    %143 = vector.broadcast %cst_70 : f32 to vector<8x128xf32>
    %144 = arith.addf %143, %142 : vector<8x128xf32>
    %cst_71 = arith.constant 1.000000e+00 : f32
    %145 = vector.broadcast %cst_71 : f32 to vector<8x128xf32>
    %146 = arith.divf %145, %144 : vector<8x128xf32>
    %cst_72 = arith.constant 1.06140542 : f32
    %147 = vector.broadcast %cst_72 : f32 to vector<8x128xf32>
    %148 = arith.mulf %147, %146 : vector<8x128xf32>
    %cst_73 = arith.constant 1.45315206 : f32
    %149 = vector.broadcast %cst_73 : f32 to vector<8x128xf32>
    %150 = arith.subf %148, %149 : vector<8x128xf32>
    %151 = arith.mulf %150, %146 : vector<8x128xf32>
    %cst_74 = arith.constant 1.42141378 : f32
    %152 = vector.broadcast %cst_74 : f32 to vector<8x128xf32>
    %153 = arith.addf %151, %152 : vector<8x128xf32>
    %154 = arith.mulf %153, %146 : vector<8x128xf32>
    %cst_75 = arith.constant 0.284496725 : f32
    %155 = vector.broadcast %cst_75 : f32 to vector<8x128xf32>
    %156 = arith.subf %154, %155 : vector<8x128xf32>
    %157 = arith.mulf %156, %146 : vector<8x128xf32>
    %cst_76 = arith.constant 0.254829586 : f32
    %158 = vector.broadcast %cst_76 : f32 to vector<8x128xf32>
    %159 = arith.addf %157, %158 : vector<8x128xf32>
    %160 = arith.mulf %159, %146 : vector<8x128xf32>
    %cst_77 = arith.constant 0.000000e+00 : f32
    %161 = vector.broadcast %cst_77 : f32 to vector<8x128xf32>
    %162 = arith.subf %161, %140 : vector<8x128xf32>
    %163 = arith.mulf %162, %140 : vector<8x128xf32>
    %164 = math.exp %163 : vector<8x128xf32>
    %165 = arith.mulf %160, %164 : vector<8x128xf32>
    %cst_78 = arith.constant 1.000000e+00 : f32
    %166 = vector.broadcast %cst_78 : f32 to vector<8x128xf32>
    %167 = arith.subf %166, %165 : vector<8x128xf32>
    %cst_79 = arith.constant 0.000000e+00 : f32
    %168 = vector.broadcast %cst_79 : f32 to vector<8x128xf32>
    %169 = arith.cmpf oge, %139, %168 : vector<8x128xf32>
    %cst_80 = arith.constant 0.000000e+00 : f32
    %170 = vector.broadcast %cst_80 : f32 to vector<8x128xf32>
    %171 = arith.subf %170, %167 : vector<8x128xf32>
    %172 = arith.select %169, %167, %171 : vector<8x128xi1>, vector<8x128xf32>
    %cst_81 = arith.constant 5.000000e-01 : f32
    %173 = vector.broadcast %cst_81 : f32 to vector<8x128xf32>
    %174 = arith.mulf %173, %137 : vector<8x128xf32>
    %cst_82 = arith.constant 1.000000e+00 : f32
    %175 = vector.broadcast %cst_82 : f32 to vector<8x128xf32>
    %176 = arith.addf %175, %172 : vector<8x128xf32>
    %177 = arith.mulf %174, %176 : vector<8x128xf32>
    %178 = arith.truncf %177 : vector<8x128xf32> to vector<8x128xbf16>
    %c0_83 = arith.constant 0 : index
    %c0_84 = arith.constant 0 : index
    %c0_85 = arith.constant 0 : index
    %179 = vector.load %arg15[%c0_83, %c0_84, %c0_85] : memref<2x128x64xbf16, #tpu.memory_space<vmem>>, vector<1x128x64xbf16>
    %180 = vector.shape_cast %179 : vector<1x128x64xbf16> to vector<128x64xbf16>
    %cst_86 = arith.constant dense<0.000000e+00> : vector<8x64xf32>
    %181 = tpu.matmul %178, %180, %cst_86 {dimension_numbers = #tpu.dot_dimension_numbers<[1], [0], [0], [1], [0, 0, 1, 1], [], []>} : vector<8x128xbf16>, vector<128x64xbf16>, vector<8x64xf32> -> vector<8x64xf32>
    %c0_87 = arith.constant 0 : index
    %c0_88 = arith.constant 0 : index
    %c0_89 = arith.constant 0 : index
    %182 = vector.load %arg16[%c0_87, %c0_88, %c0_89] : memref<2x1x64xf32, #tpu.memory_space<vmem>>, vector<1x1x64xf32>
    %183 = vector.shape_cast %182 : vector<1x1x64xf32> to vector<1x64xf32>
    %184 = vector.broadcast %183 : vector<1x64xf32> to vector<8x64xf32>
    %185 = arith.addf %181, %184 : vector<8x64xf32>
    %186 = arith.addf %129, %185 : vector<8x64xf32>
    %c0_90 = arith.constant 0 : index
    %c0_91 = arith.constant 0 : index
    %c0_92 = arith.constant 0 : index
    %187 = vector.load %arg17[%c0_90, %c0_91, %c0_92] : memref<2x1x64xf32, #tpu.memory_space<vmem>>, vector<1x1x64xf32>
    %188 = vector.shape_cast %187 : vector<1x1x64xf32> to vector<1x64xf32>
    %c0_93 = arith.constant 0 : index
    %c0_94 = arith.constant 0 : index
    %c0_95 = arith.constant 0 : index
    %189 = vector.load %arg18[%c0_93, %c0_94, %c0_95] : memref<2x1x64xf32, #tpu.memory_space<vmem>>, vector<1x1x64xf32>
    %190 = vector.shape_cast %189 : vector<1x1x64xf32> to vector<1x64xf32>
    %cst_96 = arith.constant dense<0.000000e+00> : vector<8xf32>
    %191 = vector.multi_reduction <add>, %186, %cst_96 [1] : vector<8x64xf32> to vector<8xf32>
    %192 = vector.shape_cast %191 : vector<8xf32> to vector<8x1xf32>
    %cst_97 = arith.constant 6.400000e+01 : f32
    %193 = vector.broadcast %cst_97 : f32 to vector<8x1xf32>
    %194 = arith.divf %192, %193 : vector<8x1xf32>
    %195 = vector.broadcast %194 : vector<8x1xf32> to vector<8x64xf32>
    %196 = arith.subf %186, %195 : vector<8x64xf32>
    %197 = arith.mulf %196, %196 : vector<8x64xf32>
    %cst_98 = arith.constant dense<0.000000e+00> : vector<8xf32>
    %198 = vector.multi_reduction <add>, %197, %cst_98 [1] : vector<8x64xf32> to vector<8xf32>
    %199 = vector.shape_cast %198 : vector<8xf32> to vector<8x1xf32>
    %cst_99 = arith.constant 6.400000e+01 : f32
    %200 = vector.broadcast %cst_99 : f32 to vector<8x1xf32>
    %201 = arith.divf %199, %200 : vector<8x1xf32>
    %202 = vector.broadcast %194 : vector<8x1xf32> to vector<8x64xf32>
    %203 = arith.subf %186, %202 : vector<8x64xf32>
    %cst_100 = arith.constant 9.99999996E-13 : f32
    %204 = vector.broadcast %cst_100 : f32 to vector<8x1xf32>
    %205 = arith.addf %201, %204 : vector<8x1xf32>
    %206 = math.rsqrt %205 : vector<8x1xf32>
    %207 = vector.broadcast %206 : vector<8x1xf32> to vector<8x64xf32>
    %208 = arith.mulf %203, %207 : vector<8x64xf32>
    %209 = vector.broadcast %188 : vector<1x64xf32> to vector<8x64xf32>
    %210 = arith.mulf %208, %209 : vector<8x64xf32>
    %211 = vector.broadcast %190 : vector<1x64xf32> to vector<8x64xf32>
    %212 = arith.addf %210, %211 : vector<8x64xf32>
    %213 = arith.truncf %212 : vector<8x64xf32> to vector<8x64xbf16>
    %c1 = arith.constant 1 : index
    %c0_101 = arith.constant 0 : index
    %c0_102 = arith.constant 0 : index
    %214 = vector.load %arg7[%c1, %c0_101, %c0_102] : memref<2x64x192xbf16, #tpu.memory_space<vmem>>, vector<1x64x192xbf16>
    %215 = vector.shape_cast %214 : vector<1x64x192xbf16> to vector<64x192xbf16>
    %cst_103 = arith.constant dense<0.000000e+00> : vector<8x192xf32>
    %216 = tpu.matmul %213, %215, %cst_103 {dimension_numbers = #tpu.dot_dimension_numbers<[1], [0], [0], [1], [0, 0, 1, 1], [], []>} : vector<8x64xbf16>, vector<64x192xbf16>, vector<8x192xf32> -> vector<8x192xf32>
    %c1_104 = arith.constant 1 : index
    %c0_105 = arith.constant 0 : index
    %c0_106 = arith.constant 0 : index
    %217 = vector.load %arg8[%c1_104, %c0_105, %c0_106] : memref<2x1x192xf32, #tpu.memory_space<vmem>>, vector<1x1x192xf32>
    %218 = vector.shape_cast %217 : vector<1x1x192xf32> to vector<1x192xf32>
    %219 = vector.broadcast %218 : vector<1x192xf32> to vector<8x192xf32>
    %220 = arith.addf %216, %219 : vector<8x192xf32>
    %221 = arith.truncf %220 : vector<8x192xf32> to vector<8x192xbf16>
    %222 = vector.extract_strided_slice %221 {offsets = [0, 0], sizes = [8, 32], strides = [1, 1]} : vector<8x192xbf16> to vector<8x32xbf16>
    %223 = vector.extract_strided_slice %221 {offsets = [0, 64], sizes = [8, 32], strides = [1, 1]} : vector<8x192xbf16> to vector<8x32xbf16>
    %224 = vector.extract_strided_slice %221 {offsets = [0, 128], sizes = [8, 32], strides = [1, 1]} : vector<8x192xbf16> to vector<8x32xbf16>
    %cst_107 = arith.constant dense<0.000000e+00> : vector<8x8xf32>
    %225 = tpu.matmul %222, %223, %cst_107 {dimension_numbers = #tpu.dot_dimension_numbers<[1], [1], [0], [0], [0, 0, 1, 0], [], []>} : vector<8x32xbf16>, vector<8x32xbf16>, vector<8x8xf32> -> vector<8x8xf32>
    %cst_108 = arith.constant 0.176776692 : f32
    %226 = vector.broadcast %cst_108 : f32 to vector<8x8xf32>
    %227 = arith.mulf %225, %226 : vector<8x8xf32>
    %228 = vector.broadcast %42 : vector<1x8xf32> to vector<8x8xf32>
    %229 = arith.addf %227, %228 : vector<8x8xf32>
    %cst_109 = arith.constant dense<0xFF800000> : vector<8xf32>
    %230 = vector.multi_reduction <maximumf>, %229, %cst_109 [1] : vector<8x8xf32> to vector<8xf32>
    %231 = vector.shape_cast %230 : vector<8xf32> to vector<8x1xf32>
    %232 = vector.broadcast %231 : vector<8x1xf32> to vector<8x8xf32>
    %233 = arith.subf %229, %232 : vector<8x8xf32>
    %234 = math.exp %233 : vector<8x8xf32>
    %cst_110 = arith.constant dense<0.000000e+00> : vector<8xf32>
    %235 = vector.multi_reduction <add>, %234, %cst_110 [1] : vector<8x8xf32> to vector<8xf32>
    %236 = vector.shape_cast %235 : vector<8xf32> to vector<8x1xf32>
    %237 = tpu.reciprocal %236 {approx = true} : vector<8x1xf32> -> vector<8x1xf32>
    %238 = vector.broadcast %237 : vector<8x1xf32> to vector<8x8xf32>
    %239 = arith.mulf %234, %238 : vector<8x8xf32>
    %240 = arith.truncf %239 : vector<8x8xf32> to vector<8x8xbf16>
    %cst_111 = arith.constant dense<0.000000e+00> : vector<8x32xf32>
    %241 = tpu.matmul %240, %224, %cst_111 {dimension_numbers = #tpu.dot_dimension_numbers<[1], [0], [0], [1], [0, 0, 1, 1], [], []>} : vector<8x8xbf16>, vector<8x32xbf16>, vector<8x32xf32> -> vector<8x32xf32>
    %c0_112 = arith.constant 0 : index
    %c0_113 = arith.constant 0 : index
    %242 = vector.load %arg20[%c0_112, %c0_113] : memref<8x64xf32, #tpu.memory_space<vmem>>, vector<8x32xf32>
    tpu.vector_store %arg20[%c0_112, %c0_113], %241 {strides = array<i32>} : memref<8x64xf32, #tpu.memory_space<vmem>>, vector<8x32xf32>,
    %243 = vector.extract_strided_slice %221 {offsets = [0, 32], sizes = [8, 32], strides = [1, 1]} : vector<8x192xbf16> to vector<8x32xbf16>
    %244 = vector.extract_strided_slice %221 {offsets = [0, 96], sizes = [8, 32], strides = [1, 1]} : vector<8x192xbf16> to vector<8x32xbf16>
    %245 = vector.extract_strided_slice %221 {offsets = [0, 160], sizes = [8, 32], strides = [1, 1]} : vector<8x192xbf16> to vector<8x32xbf16>
    %cst_114 = arith.constant dense<0.000000e+00> : vector<8x8xf32>
    %246 = tpu.matmul %243, %244, %cst_114 {dimension_numbers = #tpu.dot_dimension_numbers<[1], [1], [0], [0], [0, 0, 1, 0], [], []>} : vector<8x32xbf16>, vector<8x32xbf16>, vector<8x8xf32> -> vector<8x8xf32>
    %cst_115 = arith.constant 0.176776692 : f32
    %247 = vector.broadcast %cst_115 : f32 to vector<8x8xf32>
    %248 = arith.mulf %246, %247 : vector<8x8xf32>
    %249 = vector.broadcast %42 : vector<1x8xf32> to vector<8x8xf32>
    %250 = arith.addf %248, %249 : vector<8x8xf32>
    %cst_116 = arith.constant dense<0xFF800000> : vector<8xf32>
    %251 = vector.multi_reduction <maximumf>, %250, %cst_116 [1] : vector<8x8xf32> to vector<8xf32>
    %252 = vector.shape_cast %251 : vector<8xf32> to vector<8x1xf32>
    %253 = vector.broadcast %252 : vector<8x1xf32> to vector<8x8xf32>
    %254 = arith.subf %250, %253 : vector<8x8xf32>
    %255 = math.exp %254 : vector<8x8xf32>
    %cst_117 = arith.constant dense<0.000000e+00> : vector<8xf32>
    %256 = vector.multi_reduction <add>, %255, %cst_117 [1] : vector<8x8xf32> to vector<8xf32>
    %257 = vector.shape_cast %256 : vector<8xf32> to vector<8x1xf32>
    %258 = tpu.reciprocal %257 {approx = true} : vector<8x1xf32> -> vector<8x1xf32>
    %259 = vector.broadcast %258 : vector<8x1xf32> to vector<8x8xf32>
    %260 = arith.mulf %255, %259 : vector<8x8xf32>
    %261 = arith.truncf %260 : vector<8x8xf32> to vector<8x8xbf16>
    %cst_118 = arith.constant dense<0.000000e+00> : vector<8x32xf32>
    %262 = tpu.matmul %261, %245, %cst_118 {dimension_numbers = #tpu.dot_dimension_numbers<[1], [0], [0], [1], [0, 0, 1, 1], [], []>} : vector<8x8xbf16>, vector<8x32xbf16>, vector<8x32xf32> -> vector<8x32xf32>
    %c0_119 = arith.constant 0 : index
    %c32_120 = arith.constant 32 : index
    %263 = vector.load %arg20[%c0_119, %c32_120] : memref<8x64xf32, #tpu.memory_space<vmem>>, vector<8x32xf32>
    tpu.vector_store %arg20[%c0_119, %c32_120], %262 {strides = array<i32>} : memref<8x64xf32, #tpu.memory_space<vmem>>, vector<8x32xf32>,
    %c0_121 = arith.constant 0 : index
    %c0_122 = arith.constant 0 : index
    %264 = vector.load %arg20[%c0_121, %c0_122] : memref<8x64xf32, #tpu.memory_space<vmem>>, vector<8x64xf32>
    %265 = arith.truncf %264 : vector<8x64xf32> to vector<8x64xbf16>
    %c1_123 = arith.constant 1 : index
    %c0_124 = arith.constant 0 : index
    %c0_125 = arith.constant 0 : index
    %266 = vector.load %arg9[%c1_123, %c0_124, %c0_125] : memref<2x64x64xbf16, #tpu.memory_space<vmem>>, vector<1x64x64xbf16>
    %267 = vector.shape_cast %266 : vector<1x64x64xbf16> to vector<64x64xbf16>
    %cst_126 = arith.constant dense<0.000000e+00> : vector<8x64xf32>
    %268 = tpu.matmul %265, %267, %cst_126 {dimension_numbers = #tpu.dot_dimension_numbers<[1], [0], [0], [1], [0, 0, 1, 1], [], []>} : vector<8x64xbf16>, vector<64x64xbf16>, vector<8x64xf32> -> vector<8x64xf32>
    %c1_127 = arith.constant 1 : index
    %c0_128 = arith.constant 0 : index
    %c0_129 = arith.constant 0 : index
    %269 = vector.load %arg10[%c1_127, %c0_128, %c0_129] : memref<2x1x64xf32, #tpu.memory_space<vmem>>, vector<1x1x64xf32>
    %270 = vector.shape_cast %269 : vector<1x1x64xf32> to vector<1x64xf32>
    %271 = vector.broadcast %270 : vector<1x64xf32> to vector<8x64xf32>
    %272 = arith.addf %268, %271 : vector<8x64xf32>
    %273 = arith.addf %212, %272 : vector<8x64xf32>
    %c1_130 = arith.constant 1 : index
    %c0_131 = arith.constant 0 : index
    %c0_132 = arith.constant 0 : index
    %274 = vector.load %arg11[%c1_130, %c0_131, %c0_132] : memref<2x1x64xf32, #tpu.memory_space<vmem>>, vector<1x1x64xf32>
    %275 = vector.shape_cast %274 : vector<1x1x64xf32> to vector<1x64xf32>
    %c1_133 = arith.constant 1 : index
    %c0_134 = arith.constant 0 : index
    %c0_135 = arith.constant 0 : index
    %276 = vector.load %arg12[%c1_133, %c0_134, %c0_135] : memref<2x1x64xf32, #tpu.memory_space<vmem>>, vector<1x1x64xf32>
    %277 = vector.shape_cast %276 : vector<1x1x64xf32> to vector<1x64xf32>
    %cst_136 = arith.constant dense<0.000000e+00> : vector<8xf32>
    %278 = vector.multi_reduction <add>, %273, %cst_136 [1] : vector<8x64xf32> to vector<8xf32>
    %279 = vector.shape_cast %278 : vector<8xf32> to vector<8x1xf32>
    %cst_137 = arith.constant 6.400000e+01 : f32
    %280 = vector.broadcast %cst_137 : f32 to vector<8x1xf32>
    %281 = arith.divf %279, %280 : vector<8x1xf32>
    %282 = vector.broadcast %281 : vector<8x1xf32> to vector<8x64xf32>
    %283 = arith.subf %273, %282 : vector<8x64xf32>
    %284 = arith.mulf %283, %283 : vector<8x64xf32>
    %cst_138 = arith.constant dense<0.000000e+00> : vector<8xf32>
    %285 = vector.multi_reduction <add>, %284, %cst_138 [1] : vector<8x64xf32> to vector<8xf32>
    %286 = vector.shape_cast %285 : vector<8xf32> to vector<8x1xf32>
    %cst_139 = arith.constant 6.400000e+01 : f32
    %287 = vector.broadcast %cst_139 : f32 to vector<8x1xf32>
    %288 = arith.divf %286, %287 : vector<8x1xf32>
    %289 = vector.broadcast %281 : vector<8x1xf32> to vector<8x64xf32>
    %290 = arith.subf %273, %289 : vector<8x64xf32>
    %cst_140 = arith.constant 9.99999996E-13 : f32
    %291 = vector.broadcast %cst_140 : f32 to vector<8x1xf32>
    %292 = arith.addf %288, %291 : vector<8x1xf32>
    %293 = math.rsqrt %292 : vector<8x1xf32>
    %294 = vector.broadcast %293 : vector<8x1xf32> to vector<8x64xf32>
    %295 = arith.mulf %290, %294 : vector<8x64xf32>
    %296 = vector.broadcast %275 : vector<1x64xf32> to vector<8x64xf32>
    %297 = arith.mulf %295, %296 : vector<8x64xf32>
    %298 = vector.broadcast %277 : vector<1x64xf32> to vector<8x64xf32>
    %299 = arith.addf %297, %298 : vector<8x64xf32>
    %300 = arith.truncf %299 : vector<8x64xf32> to vector<8x64xbf16>
    %c1_141 = arith.constant 1 : index
    %c0_142 = arith.constant 0 : index
    %c0_143 = arith.constant 0 : index
    %301 = vector.load %arg13[%c1_141, %c0_142, %c0_143] : memref<2x64x128xbf16, #tpu.memory_space<vmem>>, vector<1x64x128xbf16>
    %302 = vector.shape_cast %301 : vector<1x64x128xbf16> to vector<64x128xbf16>
    %cst_144 = arith.constant dense<0.000000e+00> : vector<8x128xf32>
    %303 = tpu.matmul %300, %302, %cst_144 {dimension_numbers = #tpu.dot_dimension_numbers<[1], [0], [0], [1], [0, 0, 1, 1], [], []>} : vector<8x64xbf16>, vector<64x128xbf16>, vector<8x128xf32> -> vector<8x128xf32>
    %c1_145 = arith.constant 1 : index
    %c0_146 = arith.constant 0 : index
    %c0_147 = arith.constant 0 : index
    %304 = vector.load %arg14[%c1_145, %c0_146, %c0_147] : memref<2x1x128xf32, #tpu.memory_space<vmem>>, vector<1x1x128xf32>
    %305 = vector.shape_cast %304 : vector<1x1x128xf32> to vector<1x128xf32>
    %306 = vector.broadcast %305 : vector<1x128xf32> to vector<8x128xf32>
    %307 = arith.addf %303, %306 : vector<8x128xf32>
    %cst_148 = arith.constant 0.707106769 : f32
    %308 = vector.broadcast %cst_148 : f32 to vector<8x128xf32>
    %309 = arith.mulf %307, %308 : vector<8x128xf32>
    %310 = math.absf %309 : vector<8x128xf32>
    %cst_149 = arith.constant 0.327591091 : f32
    %311 = vector.broadcast %cst_149 : f32 to vector<8x128xf32>
    %312 = arith.mulf %311, %310 : vector<8x128xf32>
    %cst_150 = arith.constant 1.000000e+00 : f32
    %313 = vector.broadcast %cst_150 : f32 to vector<8x128xf32>
    %314 = arith.addf %313, %312 : vector<8x128xf32>
    %cst_151 = arith.constant 1.000000e+00 : f32
    %315 = vector.broadcast %cst_151 : f32 to vector<8x128xf32>
    %316 = arith.divf %315, %314 : vector<8x128xf32>
    %cst_152 = arith.constant 1.06140542 : f32
    %317 = vector.broadcast %cst_152 : f32 to vector<8x128xf32>
    %318 = arith.mulf %317, %316 : vector<8x128xf32>
    %cst_153 = arith.constant 1.45315206 : f32
    %319 = vector.broadcast %cst_153 : f32 to vector<8x128xf32>
    %320 = arith.subf %318, %319 : vector<8x128xf32>
    %321 = arith.mulf %320, %316 : vector<8x128xf32>
    %cst_154 = arith.constant 1.42141378 : f32
    %322 = vector.broadcast %cst_154 : f32 to vector<8x128xf32>
    %323 = arith.addf %321, %322 : vector<8x128xf32>
    %324 = arith.mulf %323, %316 : vector<8x128xf32>
    %cst_155 = arith.constant 0.284496725 : f32
    %325 = vector.broadcast %cst_155 : f32 to vector<8x128xf32>
    %326 = arith.subf %324, %325 : vector<8x128xf32>
    %327 = arith.mulf %326, %316 : vector<8x128xf32>
    %cst_156 = arith.constant 0.254829586 : f32
    %328 = vector.broadcast %cst_156 : f32 to vector<8x128xf32>
    %329 = arith.addf %327, %328 : vector<8x128xf32>
    %330 = arith.mulf %329, %316 : vector<8x128xf32>
    %cst_157 = arith.constant 0.000000e+00 : f32
    %331 = vector.broadcast %cst_157 : f32 to vector<8x128xf32>
    %332 = arith.subf %331, %310 : vector<8x128xf32>
    %333 = arith.mulf %332, %310 : vector<8x128xf32>
    %334 = math.exp %333 : vector<8x128xf32>
    %335 = arith.mulf %330, %334 : vector<8x128xf32>
    %cst_158 = arith.constant 1.000000e+00 : f32
    %336 = vector.broadcast %cst_158 : f32 to vector<8x128xf32>
    %337 = arith.subf %336, %335 : vector<8x128xf32>
    %cst_159 = arith.constant 0.000000e+00 : f32
    %338 = vector.broadcast %cst_159 : f32 to vector<8x128xf32>
    %339 = arith.cmpf oge, %309, %338 : vector<8x128xf32>
    %cst_160 = arith.constant 0.000000e+00 : f32
    %340 = vector.broadcast %cst_160 : f32 to vector<8x128xf32>
    %341 = arith.subf %340, %337 : vector<8x128xf32>
    %342 = arith.select %339, %337, %341 : vector<8x128xi1>, vector<8x128xf32>
    %cst_161 = arith.constant 5.000000e-01 : f32
    %343 = vector.broadcast %cst_161 : f32 to vector<8x128xf32>
    %344 = arith.mulf %343, %307 : vector<8x128xf32>
    %cst_162 = arith.constant 1.000000e+00 : f32
    %345 = vector.broadcast %cst_162 : f32 to vector<8x128xf32>
    %346 = arith.addf %345, %342 : vector<8x128xf32>
    %347 = arith.mulf %344, %346 : vector<8x128xf32>
    %348 = arith.truncf %347 : vector<8x128xf32> to vector<8x128xbf16>
    %c1_163 = arith.constant 1 : index
    %c0_164 = arith.constant 0 : index
    %c0_165 = arith.constant 0 : index
    %349 = vector.load %arg15[%c1_163, %c0_164, %c0_165] : memref<2x128x64xbf16, #tpu.memory_space<vmem>>, vector<1x128x64xbf16>
    %350 = vector.shape_cast %349 : vector<1x128x64xbf16> to vector<128x64xbf16>
    %cst_166 = arith.constant dense<0.000000e+00> : vector<8x64xf32>
    %351 = tpu.matmul %348, %350, %cst_166 {dimension_numbers = #tpu.dot_dimension_numbers<[1], [0], [0], [1], [0, 0, 1, 1], [], []>} : vector<8x128xbf16>, vector<128x64xbf16>, vector<8x64xf32> -> vector<8x64xf32>
    %c1_167 = arith.constant 1 : index
    %c0_168 = arith.constant 0 : index
    %c0_169 = arith.constant 0 : index
    %352 = vector.load %arg16[%c1_167, %c0_168, %c0_169] : memref<2x1x64xf32, #tpu.memory_space<vmem>>, vector<1x1x64xf32>
    %353 = vector.shape_cast %352 : vector<1x1x64xf32> to vector<1x64xf32>
    %354 = vector.broadcast %353 : vector<1x64xf32> to vector<8x64xf32>
    %355 = arith.addf %351, %354 : vector<8x64xf32>
    %356 = arith.addf %299, %355 : vector<8x64xf32>
    %c1_170 = arith.constant 1 : index
    %c0_171 = arith.constant 0 : index
    %c0_172 = arith.constant 0 : index
    %357 = vector.load %arg17[%c1_170, %c0_171, %c0_172] : memref<2x1x64xf32, #tpu.memory_space<vmem>>, vector<1x1x64xf32>
    %358 = vector.shape_cast %357 : vector<1x1x64xf32> to vector<1x64xf32>
    %c1_173 = arith.constant 1 : index
    %c0_174 = arith.constant 0 : index
    %c0_175 = arith.constant 0 : index
    %359 = vector.load %arg18[%c1_173, %c0_174, %c0_175] : memref<2x1x64xf32, #tpu.memory_space<vmem>>, vector<1x1x64xf32>
    %360 = vector.shape_cast %359 : vector<1x1x64xf32> to vector<1x64xf32>
    %cst_176 = arith.constant dense<0.000000e+00> : vector<8xf32>
    %361 = vector.multi_reduction <add>, %356, %cst_176 [1] : vector<8x64xf32> to vector<8xf32>
    %362 = vector.shape_cast %361 : vector<8xf32> to vector<8x1xf32>
    %cst_177 = arith.constant 6.400000e+01 : f32
    %363 = vector.broadcast %cst_177 : f32 to vector<8x1xf32>
    %364 = arith.divf %362, %363 : vector<8x1xf32>
    %365 = vector.broadcast %364 : vector<8x1xf32> to vector<8x64xf32>
    %366 = arith.subf %356, %365 : vector<8x64xf32>
    %367 = arith.mulf %366, %366 : vector<8x64xf32>
    %cst_178 = arith.constant dense<0.000000e+00> : vector<8xf32>
    %368 = vector.multi_reduction <add>, %367, %cst_178 [1] : vector<8x64xf32> to vector<8xf32>
    %369 = vector.shape_cast %368 : vector<8xf32> to vector<8x1xf32>
    %cst_179 = arith.constant 6.400000e+01 : f32
    %370 = vector.broadcast %cst_179 : f32 to vector<8x1xf32>
    %371 = arith.divf %369, %370 : vector<8x1xf32>
    %372 = vector.broadcast %364 : vector<8x1xf32> to vector<8x64xf32>
    %373 = arith.subf %356, %372 : vector<8x64xf32>
    %cst_180 = arith.constant 9.99999996E-13 : f32
    %374 = vector.broadcast %cst_180 : f32 to vector<8x1xf32>
    %375 = arith.addf %371, %374 : vector<8x1xf32>
    %376 = math.rsqrt %375 : vector<8x1xf32>
    %377 = vector.broadcast %376 : vector<8x1xf32> to vector<8x64xf32>
    %378 = arith.mulf %373, %377 : vector<8x64xf32>
    %379 = vector.broadcast %358 : vector<1x64xf32> to vector<8x64xf32>
    %380 = arith.mulf %378, %379 : vector<8x64xf32>
    %381 = vector.broadcast %360 : vector<1x64xf32> to vector<8x64xf32>
    %382 = arith.addf %380, %381 : vector<8x64xf32>
    %383 = vector.extract_strided_slice %382 {offsets = [0, 0], sizes = [1, 64], strides = [1, 1]} : vector<8x64xf32> to vector<1x64xf32>
    %384 = vector.shape_cast %383 : vector<1x64xf32> to vector<1x1x64xf32>
    %c0_181 = arith.constant 0 : index
    %c0_182 = arith.constant 0 : index
    %c0_183 = arith.constant 0 : index
    %385 = vector.load %arg19[%c0_181, %c0_182, %c0_183] : memref<1x1x64xf32, #tpu.memory_space<vmem>>, vector<1x1x64xf32>
    tpu.vector_store %arg19[%c0_181, %c0_182, %c0_183], %384 {strides = array<i32>} : memref<1x1x64xf32, #tpu.memory_space<vmem>>, vector<1x1x64xf32>,
    return
  }
  func.func @transform_0(%arg0: i32) -> (i32, i32, i32) {
    %c0_i32 = arith.constant 0 : i32
    %c0_i32_0 = arith.constant 0 : i32
    %c0_i32_1 = arith.constant 0 : i32
    return %arg0, %c0_i32, %c0_i32_0 : i32, i32, i32
  }
  func.func @transform_1(%arg0: i32) -> (i32, i32, i32) {
    %c0_i32 = arith.constant 0 : i32
    %c0_i32_0 = arith.constant 0 : i32
    %c0_i32_1 = arith.constant 0 : i32
    return %arg0, %c0_i32, %c0_i32_0 : i32, i32, i32
  }
  func.func @transform_2(%arg0: i32) -> (i32, i32) {
    %c0_i32 = arith.constant 0 : i32
    %c0_i32_0 = arith.constant 0 : i32
    %c0_i32_1 = arith.constant 0 : i32
    return %c0_i32, %c0_i32_0 : i32, i32
  }
  func.func @transform_3(%arg0: i32) -> (i32, i32) {
    %c0_i32 = arith.constant 0 : i32
    %c0_i32_0 = arith.constant 0 : i32
    %c0_i32_1 = arith.constant 0 : i32
    return %c0_i32, %c0_i32_0 : i32, i32
  }
  func.func @transform_4(%arg0: i32) -> (i32, i32) {
    %c0_i32 = arith.constant 0 : i32
    %c0_i32_0 = arith.constant 0 : i32
    %c0_i32_1 = arith.constant 0 : i32
    return %c0_i32, %c0_i32_0 : i32, i32
  }
  func.func @transform_5(%arg0: i32) -> (i32, i32) {
    %c0_i32 = arith.constant 0 : i32
    %c0_i32_0 = arith.constant 0 : i32
    %c0_i32_1 = arith.constant 0 : i32
    return %c0_i32, %c0_i32_0 : i32, i32
  }
  func.func @transform_6(%arg0: i32) -> (i32, i32, i32) {
    %c0_i32 = arith.constant 0 : i32
    %c0_i32_0 = arith.constant 0 : i32
    %c0_i32_1 = arith.constant 0 : i32
    %c0_i32_2 = arith.constant 0 : i32
    return %c0_i32, %c0_i32_0, %c0_i32_1 : i32, i32, i32
  }
  func.func @transform_7(%arg0: i32) -> (i32, i32, i32) {
    %c0_i32 = arith.constant 0 : i32
    %c0_i32_0 = arith.constant 0 : i32
    %c0_i32_1 = arith.constant 0 : i32
    %c0_i32_2 = arith.constant 0 : i32
    return %c0_i32, %c0_i32_0, %c0_i32_1 : i32, i32, i32
  }
  func.func @transform_8(%arg0: i32) -> (i32, i32, i32) {
    %c0_i32 = arith.constant 0 : i32
    %c0_i32_0 = arith.constant 0 : i32
    %c0_i32_1 = arith.constant 0 : i32
    %c0_i32_2 = arith.constant 0 : i32
    return %c0_i32, %c0_i32_0, %c0_i32_1 : i32, i32, i32
  }
  func.func @transform_9(%arg0: i32) -> (i32, i32, i32) {
    %c0_i32 = arith.constant 0 : i32
    %c0_i32_0 = arith.constant 0 : i32
    %c0_i32_1 = arith.constant 0 : i32
    %c0_i32_2 = arith.constant 0 : i32
    return %c0_i32, %c0_i32_0, %c0_i32_1 : i32, i32, i32
  }
  func.func @transform_10(%arg0: i32) -> (i32, i32, i32) {
    %c0_i32 = arith.constant 0 : i32
    %c0_i32_0 = arith.constant 0 : i32
    %c0_i32_1 = arith.constant 0 : i32
    %c0_i32_2 = arith.constant 0 : i32
    return %c0_i32, %c0_i32_0, %c0_i32_1 : i32, i32, i32
  }
  func.func @transform_11(%arg0: i32) -> (i32, i32, i32) {
    %c0_i32 = arith.constant 0 : i32
    %c0_i32_0 = arith.constant 0 : i32
    %c0_i32_1 = arith.constant 0 : i32
    %c0_i32_2 = arith.constant 0 : i32
    return %c0_i32, %c0_i32_0, %c0_i32_1 : i32, i32, i32
  }
  func.func @transform_12(%arg0: i32) -> (i32, i32, i32) {
    %c0_i32 = arith.constant 0 : i32
    %c0_i32_0 = arith.constant 0 : i32
    %c0_i32_1 = arith.constant 0 : i32
    %c0_i32_2 = arith.constant 0 : i32
    return %c0_i32, %c0_i32_0, %c0_i32_1 : i32, i32, i32
  }
  func.func @transform_13(%arg0: i32) -> (i32, i32, i32) {
    %c0_i32 = arith.constant 0 : i32
    %c0_i32_0 = arith.constant 0 : i32
    %c0_i32_1 = arith.constant 0 : i32
    %c0_i32_2 = arith.constant 0 : i32
    return %c0_i32, %c0_i32_0, %c0_i32_1 : i32, i32, i32
  }
  func.func @transform_14(%arg0: i32) -> (i32, i32, i32) {
    %c0_i32 = arith.constant 0 : i32
    %c0_i32_0 = arith.constant 0 : i32
    %c0_i32_1 = arith.constant 0 : i32
    %c0_i32_2 = arith.constant 0 : i32
    return %c0_i32, %c0_i32_0, %c0_i32_1 : i32, i32, i32
  }
  func.func @transform_15(%arg0: i32) -> (i32, i32, i32) {
    %c0_i32 = arith.constant 0 : i32
    %c0_i32_0 = arith.constant 0 : i32
    %c0_i32_1 = arith.constant 0 : i32
    %c0_i32_2 = arith.constant 0 : i32
    return %c0_i32, %c0_i32_0, %c0_i32_1 : i32, i32, i32
  }
  func.func @transform_16(%arg0: i32) -> (i32, i32, i32) {
    %c0_i32 = arith.constant 0 : i32
    %c0_i32_0 = arith.constant 0 : i32
    %c0_i32_1 = arith.constant 0 : i32
    %c0_i32_2 = arith.constant 0 : i32
    return %c0_i32, %c0_i32_0, %c0_i32_1 : i32, i32, i32
  }
  func.func @transform_17(%arg0: i32) -> (i32, i32, i32) {
    %c0_i32 = arith.constant 0 : i32
    %c0_i32_0 = arith.constant 0 : i32
    %c0_i32_1 = arith.constant 0 : i32
    %c0_i32_2 = arith.constant 0 : i32
    return %c0_i32, %c0_i32_0, %c0_i32_1 : i32, i32, i32
  }
  func.func @transform_18(%arg0: i32) -> (i32, i32, i32) {
    %c0_i32 = arith.constant 0 : i32
    %c0_i32_0 = arith.constant 0 : i32
    %c0_i32_1 = arith.constant 0 : i32
    return %arg0, %c0_i32, %c0_i32_0 : i32, i32, i32
  }
}

</mosaic_0001>

<llo_original>
// kernel: text_encoder_forward.1
$region0: #{text_encoder_forward.1}
  #allocation0 [shape = 'u32[]', space=smem, size = 0x4, offset = 0x4, fixed_abs, tag = 'smem constant byte address 0x4 - core index']
  #allocation1 [shape = 'u32[144,128]{1,0:T(1,128)}', space=vmem, size = 0x12000, scoped, tag = 'internal scratch']
  #allocation2 [shape = 'f32[8,64]{1,0:T(8,128)}', space=vmem, size = 0x1000, scoped, tag = 'scratch operand']
  %s0 = inlined_call_operand.vmem [shape: s32[2,8,1], index: 0, kind: input, shape index: {}]
  %s1 = inlined_call_operand.vmem [shape: f32[2,1,8], index: 1, kind: input, shape index: {}]
  %s2 = inlined_call_operand.vmem [shape: bf16[64,64], index: 2, kind: input, shape index: {}]
  %s3 = inlined_call_operand.vmem [shape: f32[8,64], index: 3, kind: input, shape index: {}]
  %s4 = inlined_call_operand.hbm [shape: f32[1,64], index: 4, kind: input, shape index: {}]
  %s5 = inlined_call_operand.hbm [shape: f32[1,64], index: 5, kind: input, shape index: {}]
  %s6 = inlined_call_operand.vmem [shape: bf16[2,64,192], index: 6, kind: input, shape index: {}]
  %s7 = inlined_call_operand.vmem [shape: f32[2,1,192], index: 7, kind: input, shape index: {}]
  %s8 = inlined_call_operand.vmem [shape: bf16[2,64,64], index: 8, kind: input, shape index: {}]
  %s9 = inlined_call_operand.vmem [shape: f32[2,1,64], index: 9, kind: input, shape index: {}]
  %s10 = inlined_call_operand.vmem [shape: f32[2,1,64], index: 10, kind: input, shape index: {}]
  %s11 = inlined_call_operand.vmem [shape: f32[2,1,64], index: 11, kind: input, shape index: {}]
  %s12 = inlined_call_operand.hbm [shape: bf16[2,64,128], index: 12, kind: input, shape index: {}]
  %s13 = inlined_call_operand.vmem [shape: f32[2,1,128], index: 13, kind: input, shape index: {}]
  %s14 = inlined_call_operand.vmem [shape: bf16[2,128,64], index: 14, kind: input, shape index: {}]
  %s15 = inlined_call_operand.vmem [shape: f32[2,1,64], index: 15, kind: input, shape index: {}]
  %s16 = inlined_call_operand.vmem [shape: f32[2,1,64], index: 16, kind: input, shape index: {}]
  %s17 = inlined_call_operand.hbm [shape: f32[2,1,64], index: 17, kind: input, shape index: {}]
  %s18 = inlined_call_operand.hbm [shape: f32[2,1,64], index: 18, kind: output, shape index: {}]
  %s19 = sld [smem:[#allocation0]]
  $region121: #{text_encoder_forward.1} parent=0
    _
  %s21 = ssub.s32 1, %s19
  %s22 = scalar_select 0, %s21, %s19
  $region1: #{text_encoder_forward.1} parent=0
    #allocation3 [shape = 'u8[512]{0}', space=vmem, size = 0x400, scoped, tag = 'input window, operand 4, single buffered']
    #allocation4 [shape = 's32[2]{0}', space=sflag, size = 0x8, scoped, tag = 'scoped memory for text_encoder_forward.1']
    #allocation5 [shape = 's32[2]{0}', space=sflag, size = 0x8, scoped, tag = 'scoped memory for text_encoder_forward.1']
    #allocation6 [shape = 'u8[512]{0}', space=vmem, size = 0x400, scoped, tag = 'input window, operand 5, single buffered']
    #allocation7 [shape = 's32[1]{0}', space=sflag, size = 0x4, scoped, tag = 'scoped memory for text_encoder_forward.1']
    #allocation8 [shape = 'u8[32768]{0}', space=vmem, size = 0x8000, scoped, tag = 'input window, operand 12, single buffered']
    #allocation9 [shape = 'u8[1024]{0}', space=vmem, size = 0x400, scoped, tag = 'input window, operand 17, single buffered']
    #allocation10 [shape = 's32[1]{0}', space=sflag, size = 0x4, scoped, tag = 'scoped memory for text_encoder_forward.1']
    #allocation11 [shape = 'u8[1024]{0}', space=vmem, size = 0x400, scoped, tag = 'output window, operand 0']
    %23 = vsyncpa [#allocation4], 0
    %24 = vsyncpa [#allocation7], 0
    %25 = vsyncpa [#allocation10], 0
    %26 = vsyncpa [#allocation5], 0
    %s27 = scalar_lea.sflag [#allocation5], 1
    %28 = vsyncpa %s27, 0
    loop: start=0, step=1, limit=4
    $region2: #{text_encoder_forward.1} parent=1 // loop_pre_header
      _
    $region3: #{text_encoder_forward.1} parent=1 // loop_header
      %s30 = sphi 0, %s34
      %p31 = scmp.ge.s32.totalorder %s30, 4
      %s40 = sphi 0, %s42
      %s43 = sphi 0, %s40
      %s44 = sphi 0, %s43
      %s60 = sphi 0, %s44
      %s66 = sphi 0, %s68
      %s69 = sphi 0, %s66
      %s70 = sphi 0, %s69
      %s86 = sphi 0, %s70
      %s90 = sphi 0, %s90
      %s92 = sphi 0, %s90
      %s93 = sphi 0, %s92
      %s107 = sphi 0, %s93
      %s111 = sphi 0, %s111
      %s113 = sphi 0, %s111
      %s114 = sphi 0, %s113
      %s128 = sphi 0, %s114
      %s132 = sphi 0, %s132
      %s134 = sphi 0, %s132
      %s135 = sphi 0, %s134
      %s149 = sphi 0, %s135
      %s153 = sphi 0, %s153
      %s155 = sphi 0, %s153
      %s156 = sphi 0, %s155
      %s170 = sphi 0, %s156
      %s174 = sphi 0, %s174
      %s176 = sphi 0, %s174
      %s177 = sphi 0, %s176
      %s191 = sphi 0, %s177
      %s195 = sphi 0, %s195
      %s197 = sphi 0, %s195
      %s198 = sphi 0, %s197
      %s212 = sphi 0, %s198
      %s216 = sphi 0, %s216
      %s218 = sphi 0, %s216
      %s219 = sphi 0, %s218
      %s233 = sphi 0, %s219
      %s237 = sphi 0, %s237
      %s239 = sphi 0, %s237
      %s240 = sphi 0, %s239
      %s254 = sphi 0, %s240
      %s258 = sphi 0, %s258
      %s260 = sphi 0, %s258
      %s261 = sphi 0, %s260
      %s275 = sphi 0, %s261
      %s279 = sphi 0, %s279
      %s281 = sphi 0, %s279
      %s282 = sphi 0, %s281
      %s296 = sphi 0, %s282
      %s300 = sphi 0, %s300
      %s302 = sphi 0, %s300
      %s303 = sphi 0, %s302
      %s317 = sphi 0, %s303
      %s321 = sphi 0, %s321
      %s323 = sphi 0, %s321
      %s324 = sphi 0, %s323
      %s338 = sphi 0, %s324
      %s342 = sphi 0, %s342
      %s344 = sphi 0, %s342
      %s345 = sphi 0, %s344
      %s359 = sphi 0, %s345
      %s363 = sphi 0, %s363
      %s365 = sphi 0, %s363
      %s366 = sphi 0, %s365
      %s380 = sphi 0, %s366
      %s384 = sphi 0, %s384
      %s386 = sphi 0, %s384
      %s387 = sphi 0, %s386
      %s401 = sphi 0, %s387
      %s405 = sphi 0, %s405
      %s407 = sphi 0, %s405
      %s408 = sphi 0, %s407
      %s422 = sphi 0, %s408
      %s428 = sphi 0, %s430
      %s431 = sphi 0, %s428
      %s432 = sphi 0, %s431
      %s448 = sphi 0, %s432
    $region4: #{text_encoder_forward.1} parent=1 // loop_header_branch
      %33 = sbr.rel (%p31) target = $region8
    $region5: #{text_encoder_forward.1} parent=1 // loop_body
      %s35 = ssub.s32 %s30, 1
      %s36 = ssub.s32 %s30, 2
      %s37 = sadd.s32 %s30, 1
      %s38 = ssub.s32 %s30, %s37
      %p39 = scmp.eq.s32.totalorder %s38, 0
      %s41 = sadd.s32 %s40, 1
      %s42 = scalar_select %p39, %s40, %s41
      %p45 = pneg %p39
      %p46 = scmp.eq.s32.totalorder %s30, 1
      %p47 = por %p45, %p46
      %p48 = scmp.ne.s32.totalorder %s40, %s43
      %p49 = scmp.eq.s32.totalorder %s30, 0
      %p50 = por %p48, %p49
      %p51 = scmp.ne.s32.totalorder %s40, %s43
      %p52 = scmp.eq.s32.totalorder %s35, 1
      %p53 = por %p51, %p52
      %p54 = scmp.ne.s32.totalorder %s43, %s44
      %p55 = scmp.eq.s32.totalorder %s35, 0
      %p56 = por %p54, %p55
      %p57 = scmp.ne.s32.totalorder %s43, %s44
      %p58 = scmp.eq.s32.totalorder %s36, 1
      %p59 = por %p57, %p58
      %p61 = scmp.ne.s32.totalorder %s44, %s60
      %p62 = scmp.eq.s32.totalorder %s36, 0
      %p63 = por %p61, %p62
      %s64 = ssub.s32 %s30, %s37
      %p65 = scmp.eq.s32.totalorder %s64, 0
      %s67 = sadd.s32 %s66, 1
      %s68 = scalar_select %p65, %s66, %s67
      %p71 = pneg %p65
      %p72 = scmp.eq.s32.totalorder %s30, 1
      %p73 = por %p71, %p72
      %p74 = scmp.ne.s32.totalorder %s66, %s69
      %p75 = scmp.eq.s32.totalorder %s30, 0
      %p76 = por %p74, %p75
      %p77 = scmp.ne.s32.totalorder %s66, %s69
      %p78 = scmp.eq.s32.totalorder %s35, 1
      %p79 = por %p77, %p78
      %p80 = scmp.ne.s32.totalorder %s69, %s70
      %p81 = scmp.eq.s32.totalorder %s35, 0
      %p82 = por %p80, %p81
      %p83 = scmp.ne.s32.totalorder %s69, %s70
      %p84 = scmp.eq.s32.totalorder %s36, 1
      %p85 = por %p83, %p84
      %p87 = scmp.ne.s32.totalorder %s70, %s86
      %p88 = scmp.eq.s32.totalorder %s36, 0
      %p89 = por %p87, %p88
      %s91 = sadd.s32 %s90, 1
      %p94 = scmp.eq.s32.totalorder %s30, 1
      %p95 = scmp.ne.s32.totalorder %s90, %s92
      %p96 = scmp.eq.s32.totalorder %s30, 0
      %p97 = por %p95, %p96
      %p98 = scmp.ne.s32.totalorder %s90, %s92
      %p99 = scmp.eq.s32.totalorder %s35, 1
      %p100 = por %p98, %p99
      %p101 = scmp.ne.s32.totalorder %s92, %s93
      %p102 = scmp.eq.s32.totalorder %s35, 0
      %p103 = por %p101, %p102
      %p104 = scmp.ne.s32.totalorder %s92, %s93
      %p105 = scmp.eq.s32.totalorder %s36, 1
      %p106 = por %p104, %p105
      %p108 = scmp.ne.s32.totalorder %s93, %s107
      %p109 = scmp.eq.s32.totalorder %s36, 0
      %p110 = por %p108, %p109
      %s112 = sadd.s32 %s111, 1
      %p115 = scmp.eq.s32.totalorder %s30, 1
      %p116 = scmp.ne.s32.totalorder %s111, %s113
      %p117 = scmp.eq.s32.totalorder %s30, 0
      %p118 = por %p116, %p117
      %p119 = scmp.ne.s32.totalorder %s111, %s113
      %p120 = scmp.eq.s32.totalorder %s35, 1
      %p121 = por %p119, %p120
      %p122 = scmp.ne.s32.totalorder %s113, %s114
      %p123 = scmp.eq.s32.totalorder %s35, 0
      %p124 = por %p122, %p123
      %p125 = scmp.ne.s32.totalorder %s113, %s114
      %p126 = scmp.eq.s32.totalorder %s36, 1
      %p127 = por %p125, %p126
      %p129 = scmp.ne.s32.totalorder %s114, %s128
      %p130 = scmp.eq.s32.totalorder %s36, 0
      %p131 = por %p129, %p130
      %s133 = sadd.s32 %s132, 1
      %p136 = scmp.eq.s32.totalorder %s30, 1
      %p137 = scmp.ne.s32.totalorder %s132, %s134
      %p138 = scmp.eq.s32.totalorder %s30, 0
      %p139 = por %p137, %p138
      %p140 = scmp.ne.s32.totalorder %s132, %s134
      %p141 = scmp.eq.s32.totalorder %s35, 1
      %p142 = por %p140, %p141
      %p143 = scmp.ne.s32.totalorder %s134, %s135
      %p144 = scmp.eq.s32.totalorder %s35, 0
      %p145 = por %p143, %p144
      %p146 = scmp.ne.s32.totalorder %s134, %s135
      %p147 = scmp.eq.s32.totalorder %s36, 1
      %p148 = por %p146, %p147
      %p150 = scmp.ne.s32.totalorder %s135, %s149
      %p151 = scmp.eq.s32.totalorder %s36, 0
      %p152 = por %p150, %p151
      %s154 = sadd.s32 %s153, 1
      %p157 = scmp.eq.s32.totalorder %s30, 1
      %p158 = scmp.ne.s32.totalorder %s153, %s155
      %p159 = scmp.eq.s32.totalorder %s30, 0
      %p160 = por %p158, %p159
      %p161 = scmp.ne.s32.totalorder %s153, %s155
      %p162 = scmp.eq.s32.totalorder %s35, 1
      %p163 = por %p161, %p162
      %p164 = scmp.ne.s32.totalorder %s155, %s156
      %p165 = scmp.eq.s32.totalorder %s35, 0
      %p166 = por %p164, %p165
      %p167 = scmp.ne.s32.totalorder %s155, %s156
      %p168 = scmp.eq.s32.totalorder %s36, 1
      %p169 = por %p167, %p168
      %p171 = scmp.ne.s32.totalorder %s156, %s170
      %p172 = scmp.eq.s32.totalorder %s36, 0
      %p173 = por %p171, %p172
      %s175 = sadd.s32 %s174, 1
      %p178 = scmp.eq.s32.totalorder %s30, 1
      %p179 = scmp.ne.s32.totalorder %s174, %s176
      %p180 = scmp.eq.s32.totalorder %s30, 0
      %p181 = por %p179, %p180
      %p182 = scmp.ne.s32.totalorder %s174, %s176
      %p183 = scmp.eq.s32.totalorder %s35, 1
      %p184 = por %p182, %p183
      %p185 = scmp.ne.s32.totalorder %s176, %s177
      %p186 = scmp.eq.s32.totalorder %s35, 0
      %p187 = por %p185, %p186
      %p188 = scmp.ne.s32.totalorder %s176, %s177
      %p189 = scmp.eq.s32.totalorder %s36, 1
      %p190 = por %p188, %p189
      %p192 = scmp.ne.s32.totalorder %s177, %s191
      %p193 = scmp.eq.s32.totalorder %s36, 0
      %p194 = por %p192, %p193
      %s196 = sadd.s32 %s195, 1
      %p199 = scmp.eq.s32.totalorder %s30, 1
      %p200 = scmp.ne.s32.totalorder %s195, %s197
      %p201 = scmp.eq.s32.totalorder %s30, 0
      %p202 = por %p200, %p201
      %p203 = scmp.ne.s32.totalorder %s195, %s197
      %p204 = scmp.eq.s32.totalorder %s35, 1
      %p205 = por %p203, %p204
      %p206 = scmp.ne.s32.totalorder %s197, %s198
      %p207 = scmp.eq.s32.totalorder %s35, 0
      %p208 = por %p206, %p207
      %p209 = scmp.ne.s32.totalorder %s197, %s198
      %p210 = scmp.eq.s32.totalorder %s36, 1
      %p211 = por %p209, %p210
      %p213 = scmp.ne.s32.totalorder %s198, %s212
      %p214 = scmp.eq.s32.totalorder %s36, 0
      %p215 = por %p213, %p214
      %s217 = sadd.s32 %s216, 1
      %p220 = scmp.eq.s32.totalorder %s30, 1
      %p221 = scmp.ne.s32.totalorder %s216, %s218
      %p222 = scmp.eq.s32.totalorder %s30, 0
      %p223 = por %p221, %p222
      %p224 = scmp.ne.s32.totalorder %s216, %s218
      %p225 = scmp.eq.s32.totalorder %s35, 1
      %p226 = por %p224, %p225
      %p227 = scmp.ne.s32.totalorder %s218, %s219
      %p228 = scmp.eq.s32.totalorder %s35, 0
      %p229 = por %p227, %p228
      %p230 = scmp.ne.s32.totalorder %s218, %s219
      %p231 = scmp.eq.s32.totalorder %s36, 1
      %p232 = por %p230, %p231
      %p234 = scmp.ne.s32.totalorder %s219, %s233
      %p235 = scmp.eq.s32.totalorder %s36, 0
      %p236 = por %p234, %p235
      %s238 = sadd.s32 %s237, 1
      %p241 = scmp.eq.s32.totalorder %s30, 1
      %p242 = scmp.ne.s32.totalorder %s237, %s239
      %p243 = scmp.eq.s32.totalorder %s30, 0
      %p244 = por %p242, %p243
      %p245 = scmp.ne.s32.totalorder %s237, %s239
      %p246 = scmp.eq.s32.totalorder %s35, 1
      %p247 = por %p245, %p246
      %p248 = scmp.ne.s32.totalorder %s239, %s240
      %p249 = scmp.eq.s32.totalorder %s35, 0
      %p250 = por %p248, %p249
      %p251 = scmp.ne.s32.totalorder %s239, %s240
      %p252 = scmp.eq.s32.totalorder %s36, 1
      %p253 = por %p251, %p252
      %p255 = scmp.ne.s32.totalorder %s240, %s254
      %p256 = scmp.eq.s32.totalorder %s36, 0
      %p257 = por %p255, %p256
      %s259 = sadd.s32 %s258, 1
      %p262 = scmp.eq.s32.totalorder %s30, 1
      %p263 = scmp.ne.s32.totalorder %s258, %s260
      %p264 = scmp.eq.s32.totalorder %s30, 0
      %p265 = por %p263, %p264
      %p266 = scmp.ne.s32.totalorder %s258, %s260
      %p267 = scmp.eq.s32.totalorder %s35, 1
      %p268 = por %p266, %p267
      %p269 = scmp.ne.s32.totalorder %s260, %s261
      %p270 = scmp.eq.s32.totalorder %s35, 0
      %p271 = por %p269, %p270
      %p272 = scmp.ne.s32.totalorder %s260, %s261
      %p273 = scmp.eq.s32.totalorder %s36, 1
      %p274 = por %p272, %p273
      %p276 = scmp.ne.s32.totalorder %s261, %s275
      %p277 = scmp.eq.s32.totalorder %s36, 0
      %p278 = por %p276, %p277
      %s280 = sadd.s32 %s279, 1
      %p283 = scmp.eq.s32.totalorder %s30, 1
      %p284 = scmp.ne.s32.totalorder %s279, %s281
      %p285 = scmp.eq.s32.totalorder %s30, 0
      %p286 = por %p284, %p285
      %p287 = scmp.ne.s32.totalorder %s279, %s281
      %p288 = scmp.eq.s32.totalorder %s35, 1
      %p289 = por %p287, %p288
      %p290 = scmp.ne.s32.totalorder %s281, %s282
      %p291 = scmp.eq.s32.totalorder %s35, 0
      %p292 = por %p290, %p291
      %p293 = scmp.ne.s32.totalorder %s281, %s282
      %p294 = scmp.eq.s32.totalorder %s36, 1
      %p295 = por %p293, %p294
      %p297 = scmp.ne.s32.totalorder %s282, %s296
      %p298 = scmp.eq.s32.totalorder %s36, 0
      %p299 = por %p297, %p298
      %s301 = sadd.s32 %s300, 1
      %p304 = scmp.eq.s32.totalorder %s30, 1
      %p305 = scmp.ne.s32.totalorder %s300, %s302
      %p306 = scmp.eq.s32.totalorder %s30, 0
      %p307 = por %p305, %p306
      %p308 = scmp.ne.s32.totalorder %s300, %s302
      %p309 = scmp.eq.s32.totalorder %s35, 1
      %p310 = por %p308, %p309
      %p311 = scmp.ne.s32.totalorder %s302, %s303
      %p312 = scmp.eq.s32.totalorder %s35, 0
      %p313 = por %p311, %p312
      %p314 = scmp.ne.s32.totalorder %s302, %s303
      %p315 = scmp.eq.s32.totalorder %s36, 1
      %p316 = por %p314, %p315
      %p318 = scmp.ne.s32.totalorder %s303, %s317
      %p319 = scmp.eq.s32.totalorder %s36, 0
      %p320 = por %p318, %p319
      %s322 = sadd.s32 %s321, 1
      %p325 = scmp.eq.s32.totalorder %s30, 1
      %p326 = scmp.ne.s32.totalorder %s321, %s323
      %p327 = scmp.eq.s32.totalorder %s30, 0
      %p328 = por %p326, %p327
      %p329 = scmp.ne.s32.totalorder %s321, %s323
      %p330 = scmp.eq.s32.totalorder %s35, 1
      %p331 = por %p329, %p330
      %p332 = scmp.ne.s32.totalorder %s323, %s324
      %p333 = scmp.eq.s32.totalorder %s35, 0
      %p334 = por %p332, %p333
      %p335 = scmp.ne.s32.totalorder %s323, %s324
      %p336 = scmp.eq.s32.totalorder %s36, 1
      %p337 = por %p335, %p336
      %p339 = scmp.ne.s32.totalorder %s324, %s338
      %p340 = scmp.eq.s32.totalorder %s36, 0
      %p341 = por %p339, %p340
      %s343 = sadd.s32 %s342, 1
      %p346 = scmp.eq.s32.totalorder %s30, 1
      %p347 = scmp.ne.s32.totalorder %s342, %s344
      %p348 = scmp.eq.s32.totalorder %s30, 0
      %p349 = por %p347, %p348
      %p350 = scmp.ne.s32.totalorder %s342, %s344
      %p351 = scmp.eq.s32.totalorder %s35, 1
      %p352 = por %p350, %p351
      %p353 = scmp.ne.s32.totalorder %s344, %s345
      %p354 = scmp.eq.s32.totalorder %s35, 0
      %p355 = por %p353, %p354
      %p356 = scmp.ne.s32.totalorder %s344, %s345
      %p357 = scmp.eq.s32.totalorder %s36, 1
      %p358 = por %p356, %p357
      %p360 = scmp.ne.s32.totalorder %s345, %s359
      %p361 = scmp.eq.s32.totalorder %s36, 0
      %p362 = por %p360, %p361
      %s364 = sadd.s32 %s363, 1
      %p367 = scmp.eq.s32.totalorder %s30, 1
      %p368 = scmp.ne.s32.totalorder %s363, %s365
      %p369 = scmp.eq.s32.totalorder %s30, 0
      %p370 = por %p368, %p369
      %p371 = scmp.ne.s32.totalorder %s363, %s365
      %p372 = scmp.eq.s32.totalorder %s35, 1
      %p373 = por %p371, %p372
      %p374 = scmp.ne.s32.totalorder %s365, %s366
      %p375 = scmp.eq.s32.totalorder %s35, 0
      %p376 = por %p374, %p375
      %p377 = scmp.ne.s32.totalorder %s365, %s366
      %p378 = scmp.eq.s32.totalorder %s36, 1
      %p379 = por %p377, %p378
      %p381 = scmp.ne.s32.totalorder %s366, %s380
      %p382 = scmp.eq.s32.totalorder %s36, 0
      %p383 = por %p381, %p382
      %s385 = sadd.s32 %s384, 1
      %p388 = scmp.eq.s32.totalorder %s30, 1
      %p389 = scmp.ne.s32.totalorder %s384, %s386
      %p390 = scmp.eq.s32.totalorder %s30, 0
      %p391 = por %p389, %p390
      %p392 = scmp.ne.s32.totalorder %s384, %s386
      %p393 = scmp.eq.s32.totalorder %s35, 1
      %p394 = por %p392, %p393
      %p395 = scmp.ne.s32.totalorder %s386, %s387
      %p396 = scmp.eq.s32.totalorder %s35, 0
      %p397 = por %p395, %p396
      %p398 = scmp.ne.s32.totalorder %s386, %s387
      %p399 = scmp.eq.s32.totalorder %s36, 1
      %p400 = por %p398, %p399
      %p402 = scmp.ne.s32.totalorder %s387, %s401
      %p403 = scmp.eq.s32.totalorder %s36, 0
      %p404 = por %p402, %p403
      %s406 = sadd.s32 %s405, 1
      %p409 = scmp.eq.s32.totalorder %s30, 1
      %p410 = scmp.ne.s32.totalorder %s405, %s407
      %p411 = scmp.eq.s32.totalorder %s30, 0
      %p412 = por %p410, %p411
      %p413 = scmp.ne.s32.totalorder %s405, %s407
      %p414 = scmp.eq.s32.totalorder %s35, 1
      %p415 = por %p413, %p414
      %p416 = scmp.ne.s32.totalorder %s407, %s408
      %p417 = scmp.eq.s32.totalorder %s35, 0
      %p418 = por %p416, %p417
      %p419 = scmp.ne.s32.totalorder %s407, %s408
      %p420 = scmp.eq.s32.totalorder %s36, 1
      %p421 = por %p419, %p420
      %p423 = scmp.ne.s32.totalorder %s408, %s422
      %p424 = scmp.eq.s32.totalorder %s36, 0
      %p425 = por %p423, %p424
      %s426 = ssub.s32 %s30, %s37
      %p427 = scmp.eq.s32.totalorder %s426, 0
      %s429 = sadd.s32 %s428, 1
      %s430 = scalar_select %p427, %s428, %s429
      %p433 = pneg %p427
      %p434 = scmp.eq.s32.totalorder %s30, 1
      %p435 = por %p433, %p434
      %p436 = scmp.ne.s32.totalorder %s428, %s431
      %p437 = scmp.eq.s32.totalorder %s30, 0
      %p438 = por %p436, %p437
      %p439 = scmp.ne.s32.totalorder %s428, %s431
      %p440 = scmp.eq.s32.totalorder %s35, 1
      %p441 = por %p439, %p440
      %p442 = scmp.ne.s32.totalorder %s431, %s432
      %p443 = scmp.eq.s32.totalorder %s35, 0
      %p444 = por %p442, %p443
      %p445 = scmp.ne.s32.totalorder %s431, %s432
      %p446 = scmp.eq.s32.totalorder %s36, 1
      %p447 = por %p445, %p446
      %p449 = scmp.ne.s32.totalorder %s432, %s448
      %p450 = scmp.eq.s32.totalorder %s36, 0
      %p451 = por %p449, %p450
      %p452 = scmp.le.s32.totalorder 1, %s30
      %p453 = scmp.lt.s32.totalorder %s30, 3
      %p454 = pnand %p452, %p453
      %p455 = pneg %p454
      // Predicated region
      $region9: #{text_encoder_forward.1} parent=5 // pred_check
        _
      $region10: #{text_encoder_forward.1} parent=5 // pred_check_branch
        %457 = sbr.rel (%p454) target = $region12
      $region11: #{text_encoder_forward.1} parent=5 // pred_region
        %s458 = ssub.s32 %s30, 1
        // Predicated region
        $region13: #{text_encoder_forward.1} parent=11 // pred_check
          %p459 = pneg %p103
        $region14: #{text_encoder_forward.1} parent=11 // pred_check_branch
          %461 = sbr.rel (%p459) target = $region16
        $region15: #{text_encoder_forward.1} parent=11 // pred_region
          _
        $region16: #{text_encoder_forward.1} parent=11 // pred_fallthru
          _
        // Predicated region
        $region17: #{text_encoder_forward.1} parent=11 // pred_check
          %p462 = pneg %p124
        $region18: #{text_encoder_forward.1} parent=11 // pred_check_branch
          %464 = sbr.rel (%p462) target = $region20
        $region19: #{text_encoder_forward.1} parent=11 // pred_region
          _
        $region20: #{text_encoder_forward.1} parent=11 // pred_fallthru
          _
        // Predicated region
        $region21: #{text_encoder_forward.1} parent=11 // pred_check
          %p465 = pneg %p145
        $region22: #{text_encoder_forward.1} parent=11 // pred_check_branch
          %467 = sbr.rel (%p465) target = $region24
        $region23: #{text_encoder_forward.1} parent=11 // pred_region
          %s469 = ssub.s32 16, 16
          %470 = vsyncadd [#allocation4], %s469
          %s472 = sshll.u32 [#allocation3], 4
          %s473 = int_to_ptr.vmem [resolvable:$true] %s472
          %475 = dma.hbm_to_vmem [thread:$0]  %s4, 16, %s473, [#allocation4]
        $region24: #{text_encoder_forward.1} parent=11 // pred_fallthru
          _
        // Predicated region
        $region25: #{text_encoder_forward.1} parent=11 // pred_check
          %p476 = pneg %p166
        $region26: #{text_encoder_forward.1} parent=11 // pred_check_branch
          %478 = sbr.rel (%p476) target = $region28
        $region27: #{text_encoder_forward.1} parent=11 // pred_region
          %s480 = ssub.s32 16, 16
          %481 = vsyncadd [#allocation7], %s480
          %s483 = sshll.u32 [#allocation6], 4
          %s484 = int_to_ptr.vmem [resolvable:$true] %s483
          %486 = dma.hbm_to_vmem [thread:$0]  %s5, 16, %s484, [#allocation7]
        $region28: #{text_encoder_forward.1} parent=11 // pred_fallthru
          _
        // Predicated region
        $region29: #{text_encoder_forward.1} parent=11 // pred_check
          %p487 = pneg %p187
        $region30: #{text_encoder_forward.1} parent=11 // pred_check_branch
          %489 = sbr.rel (%p487) target = $region32
        $region31: #{text_encoder_forward.1} parent=11 // pred_region
          _
        $region32: #{text_encoder_forward.1} parent=11 // pred_fallthru
          _
        // Predicated region
        $region33: #{text_encoder_forward.1} parent=11 // pred_check
          %p490 = pneg %p208
        $region34: #{text_encoder_forward.1} parent=11 // pred_check_branch
          %492 = sbr.rel (%p490) target = $region36
        $region35: #{text_encoder_forward.1} parent=11 // pred_region
          _
        $region36: #{text_encoder_forward.1} parent=11 // pred_fallthru
          _
        // Predicated region
        $region37: #{text_encoder_forward.1} parent=11 // pred_check
          %p493 = pneg %p229
        $region38: #{text_encoder_forward.1} parent=11 // pred_check_branch
          %495 = sbr.rel (%p493) target = $region40
        $region39: #{text_encoder_forward.1} parent=11 // pred_region
          _
        $region40: #{text_encoder_forward.1} parent=11 // pred_fallthru
          _
        // Predicated region
        $region41: #{text_encoder_forward.1} parent=11 // pred_check
          %p496 = pneg %p250
        $region42: #{text_encoder_forward.1} parent=11 // pred_check_branch
          %498 = sbr.rel (%p496) target = $region44
        $region43: #{text_encoder_forward.1} parent=11 // pred_region
          _
        $region44: #{text_encoder_forward.1} parent=11 // pred_fallthru
          _
        // Predicated region
        $region45: #{text_encoder_forward.1} parent=11 // pred_check
          %p499 = pneg %p271
        $region46: #{text_encoder_forward.1} parent=11 // pred_check_branch
          %501 = sbr.rel (%p499) target = $region48
        $region47: #{text_encoder_forward.1} parent=11 // pred_region
          _
        $region48: #{text_encoder_forward.1} parent=11 // pred_fallthru
          _
        // Predicated region
        $region49: #{text_encoder_forward.1} parent=11 // pred_check
          %p502 = pneg %p292
        $region50: #{text_encoder_forward.1} parent=11 // pred_check_branch
          %504 = sbr.rel (%p502) target = $region52
        $region51: #{text_encoder_forward.1} parent=11 // pred_region
          _
        $region52: #{text_encoder_forward.1} parent=11 // pred_fallthru
          _
        // Predicated region
        $region53: #{text_encoder_forward.1} parent=11 // pred_check
          %p505 = pneg %p313
        $region54: #{text_encoder_forward.1} parent=11 // pred_check_branch
          %507 = sbr.rel (%p505) target = $region56
        $region55: #{text_encoder_forward.1} parent=11 // pred_region
          %s509 = ssub.s32 1024, 1024
          %510 = vsyncadd [#allocation7], %s509
          %s511 = sshll.u32 [#allocation8], 4
          %s512 = int_to_ptr.vmem [resolvable:$true] %s511
          %517 = dma.hbm_to_vmem [thread:$0]  %s12, 1024, %s512, [#allocation7], 64, 64, 4
        $region56: #{text_encoder_forward.1} parent=11 // pred_fallthru
          _
        // Predicated region
        $region57: #{text_encoder_forward.1} parent=11 // pred_check
          %p518 = pneg %p334
        $region58: #{text_encoder_forward.1} parent=11 // pred_check_branch
          %520 = sbr.rel (%p518) target = $region60
        $region59: #{text_encoder_forward.1} parent=11 // pred_region
          _
        $region60: #{text_encoder_forward.1} parent=11 // pred_fallthru
          _
        // Predicated region
        $region61: #{text_encoder_forward.1} parent=11 // pred_check
          %p521 = pneg %p355
        $region62: #{text_encoder_forward.1} parent=11 // pred_check_branch
          %523 = sbr.rel (%p521) target = $region64
        $region63: #{text_encoder_forward.1} parent=11 // pred_region
          _
        $region64: #{text_encoder_forward.1} parent=11 // pred_fallthru
          _
        // Predicated region
        $region65: #{text_encoder_forward.1} parent=11 // pred_check
          %p524 = pneg %p376
        $region66: #{text_encoder_forward.1} parent=11 // pred_check_branch
          %526 = sbr.rel (%p524) target = $region68
        $region67: #{text_encoder_forward.1} parent=11 // pred_region
          _
        $region68: #{text_encoder_forward.1} parent=11 // pred_fallthru
          _
        // Predicated region
        $region69: #{text_encoder_forward.1} parent=11 // pred_check
          %p527 = pneg %p397
        $region70: #{text_encoder_forward.1} parent=11 // pred_check_branch
          %529 = sbr.rel (%p527) target = $region72
        $region71: #{text_encoder_forward.1} parent=11 // pred_region
          _
        $region72: #{text_encoder_forward.1} parent=11 // pred_fallthru
          _
        // Predicated region
        $region73: #{text_encoder_forward.1} parent=11 // pred_check
          %p530 = pneg %p418
        $region74: #{text_encoder_forward.1} parent=11 // pred_check_branch
          %532 = sbr.rel (%p530) target = $region76
        $region75: #{text_encoder_forward.1} parent=11 // pred_region
          %s534 = ssub.s32 32, 32
          %535 = vsyncadd [#allocation10], %s534
          %s536 = sshll.u32 [#allocation9], 4
          %s537 = int_to_ptr.vmem [resolvable:$true] %s536
          %542 = dma.hbm_to_vmem [thread:$0]  %s17, 32, %s537, [#allocation10], 16, 16, 1
        $region76: #{text_encoder_forward.1} parent=11 // pred_fallthru
          _
      $region12: #{text_encoder_forward.1} parent=5 // pred_fallthru
        _
      %p543 = scmp.lt.s32.totalorder %s30, 2
      // Predicated region
      $region77: #{text_encoder_forward.1} parent=5 // pred_check
        %p544 = pneg %p543
      $region78: #{text_encoder_forward.1} parent=5 // pred_check_branch
        %546 = sbr.rel (%p544) target = $region80
      $region79: #{text_encoder_forward.1} parent=5 // pred_region
        // Predicated region
        $region81: #{text_encoder_forward.1} parent=79 // pred_check
          %p547 = pneg %p50
        $region82: #{text_encoder_forward.1} parent=79 // pred_check_branch
          %549 = sbr.rel (%p547) target = $region84
        $region83: #{text_encoder_forward.1} parent=79 // pred_region
          %p550 = scmp.lt.s32.totalorder %s30, 1
          %s551 = scalar_select %p550, %s30, 1
          %s552 = smul.addr %s551, 8
          %s553 = scalar_lea.vmem %s0, %s552
        $region84: #{text_encoder_forward.1} parent=79 // pred_fallthru
          _
        // Predicated region
        $region85: #{text_encoder_forward.1} parent=79 // pred_check
          %p554 = pneg %p76
        $region86: #{text_encoder_forward.1} parent=79 // pred_check_branch
          %556 = sbr.rel (%p554) target = $region88
        $region87: #{text_encoder_forward.1} parent=79 // pred_region
          %p557 = scmp.lt.s32.totalorder %s30, 1
          %s558 = scalar_select %p557, %s30, 1
          %s559 = scalar_lea.vmem %s1, %s558
        $region88: #{text_encoder_forward.1} parent=79 // pred_fallthru
          _
      $region80: #{text_encoder_forward.1} parent=5 // pred_fallthru
        _
      %p560 = scmp.le.s32.totalorder 1, %s30
      %p561 = scmp.lt.s32.totalorder %s30, 3
      %p562 = pnand %p560, %p561
      %p563 = pneg %p562
      // Predicated region
      $region89: #{text_encoder_forward.1} parent=5 // pred_check
        _
      $region90: #{text_encoder_forward.1} parent=5 // pred_check_branch
        %565 = sbr.rel (%p562) target = $region92
      $region91: #{text_encoder_forward.1} parent=5 // pred_region
        %s566 = ssub.s32 %s30, 1
        // Predicated region
        $region93: #{text_encoder_forward.1} parent=91 // pred_check
          %p567 = pneg %p145
        $region94: #{text_encoder_forward.1} parent=91 // pred_check_branch
          %569 = sbr.rel (%p567) target = $region96
        $region95: #{text_encoder_forward.1} parent=91 // pred_region
          %570 = dma.done [#allocation4], 16
        $region96: #{text_encoder_forward.1} parent=91 // pred_fallthru
          _
        // Predicated region
        $region97: #{text_encoder_forward.1} parent=91 // pred_check
          %p571 = pneg %p166
        $region98: #{text_encoder_forward.1} parent=91 // pred_check_branch
          %573 = sbr.rel (%p571) target = $region100
        $region99: #{text_encoder_forward.1} parent=91 // pred_region
          %574 = dma.done [#allocation7], 16
        $region100: #{text_encoder_forward.1} parent=91 // pred_fallthru
          _
        // Predicated region
        $region101: #{text_encoder_forward.1} parent=91 // pred_check
          %p575 = pneg %p313
        $region102: #{text_encoder_forward.1} parent=91 // pred_check_branch
          %577 = sbr.rel (%p575) target = $region104
        $region103: #{text_encoder_forward.1} parent=91 // pred_region
          %578 = dma.done [#allocation7], 1024
        $region104: #{text_encoder_forward.1} parent=91 // pred_fallthru
          _
        // Predicated region
        $region105: #{text_encoder_forward.1} parent=91 // pred_check
          %p579 = pneg %p418
        $region106: #{text_encoder_forward.1} parent=91 // pred_check_branch
          %581 = sbr.rel (%p579) target = $region108
        $region107: #{text_encoder_forward.1} parent=91 // pred_region
          %582 = dma.done [#allocation10], 32
        $region108: #{text_encoder_forward.1} parent=91 // pred_fallthru
          _
        %p583 = scmp.lt.s32.totalorder %s35, 1
        %s584 = scalar_select %p583, %s35, 1
        %s585 = smul.addr %s584, 8
        %s586 = scalar_lea.vmem %s0, %s585
        %p587 = pneg %p56
        %p588 = pneg %p53
        %p589 = scmp.lt.s32.totalorder %s35, 1
        %s590 = scalar_select %p589, %s35, 1
        %s591 = scalar_lea.vmem %s1, %s590
        %p592 = pneg %p82
        %p593 = pneg %p79
        %p594 = pneg %p103
        %p595 = pneg %p100
        %p596 = pneg %p124
        %p597 = pneg %p121
        %p598 = pneg %p145
        %p599 = pneg %p142
        %p600 = pneg %p166
        %p601 = pneg %p163
        %p602 = pneg %p187
        %p603 = pneg %p184
        %p604 = pneg %p208
        %p605 = pneg %p205
        %p606 = pneg %p229
        %p607 = pneg %p226
        %p608 = pneg %p250
        %p609 = pneg %p247
        %p610 = pneg %p271
        %p611 = pneg %p268
        %p612 = pneg %p292
        %p613 = pneg %p289
        %p614 = pneg %p313
        %p615 = pneg %p310
        %p616 = pneg %p334
        %p617 = pneg %p331
        %p618 = pneg %p355
        %p619 = pneg %p352
        %p620 = pneg %p376
        %p621 = pneg %p373
        %p622 = pneg %p397
        %p623 = pneg %p394
        %p624 = pneg %p418
        %p625 = pneg %p415
        %p626 = pneg %p444
        %p627 = pneg %p441
        %s628 = sand.u32 %s431, 1
        %s629 = scalar_lea.sflag [#allocation5], %s628
        %s630 = sand.u32 %s431, 1
        %s631 = scalar_lea.vmem [#allocation11], %s630
        %p632 = scmp.lt.s32.totalorder %s35, 1
        %s633 = scalar_select %p632, %s35, 1
        %s634 = smul.addr %s633, 8
        %s635 = scalar_lea.vmem %s0, %s634
        %p636 = scmp.lt.s32.totalorder %s35, 1
        %s637 = scalar_select %p636, %s35, 1
        %s638 = scalar_lea.vmem %s1, %s637
        %v640 = vld [vmem:[%s635] sm:$0xff]
        %v641 = vlaneseq
        %v642 = vand.u32 %v641, 127
        %643 = vset.pattern.permute.xlu0 0
        %644 = vperm.xlu0 %643, %v640
        %v645 = vpop.permute.xlu0 %644
        %vm646 = vcmp.eq.s32.totalorder %v642, %v645
        %v647 = vsel %vm646, 1, 0
        %v648 = vcvt.s32.f32 %v647
        %v649 = vpack.c.bf16 %v648, %v648
        %v650 = vld [vmem:[%s2] sm:$0xf]
        %v651 = vld [vmem:[%s2 + $0x4] sm:$0xf]
        %v652 = vld [vmem:[%s2 + $0x8] sm:$0xf]
        %v653 = vld [vmem:[%s2 + $0xc] sm:$0xf]
        %v654 = vld [vmem:[%s2 + $0x10] sm:$0xf]
        %v655 = vld [vmem:[%s2 + $0x14] sm:$0xf]
        %v656 = vld [vmem:[%s2 + $0x18] sm:$0xf]
        %v657 = vld [vmem:[%s2 + $0x1c] sm:$0xf]
        %v658 = vld [vmem:[%s3] sm:$0xff]
        %v667 = vunpack.c.l.b16 %v650
        %v668 = vunpack.c.l.b16 %v651
        %v669 = vunpack.c.l.b16 %v652
        %v670 = vunpack.c.l.b16 %v653
        %v671 = vunpack.c.l.b16 %v654
        %v672 = vunpack.c.l.b16 %v655
        %v673 = vunpack.c.l.b16 %v656
        %v674 = vunpack.c.l.b16 %v657
        %v675 = vpack.c.b16 %v668, %v667
        %v676 = vpack.c.b16 %v670, %v669
        %v677 = vpack.c.b16 %v672, %v671
        %v678 = vpack.c.b16 %v674, %v673
        %vm683 = vcmask 523264
        %v685 = vsel %vm683, %v649, 0
        %687 = vmatprep.subr.bf16.mxu0 0
        %688 = vmatpush1.bf16.msra.mxu0 0
        %689 = vmatprep.subr.bf16.mxu0 0
        %690 = vmatpush1.bf16.msra.mxu0 0
        %691 = vmatprep.subr.bf16.mxu0 0
        %692 = vmatpush1.bf16.msra.mxu0 0
        %693 = vmatprep.subr.bf16.mxu0 0
        %694 = vmatpush1.bf16.msra.mxu0 0
        %695 = vmatprep.subr.bf16.mxu0 0
        %696 = vmatpush1.bf16.msra.mxu0 %v678
        %697 = vmatprep.subr.bf16.mxu0 0
        %698 = vmatpush1.bf16.msra.mxu0 %v677
        %699 = vmatprep.subr.bf16.mxu0 0
        %700 = vmatpush1.bf16.msra.mxu0 %v676
        %701 = vmatprep.subr.bf16.mxu0 0
        %702 = vmatpush1.bf16.msra.mxu0 %v675
        %703 = vmatprep.subr.bf16.mxu0 0
        %704 = vmatpush2.bf16.msra.mxu0 0
        %705 = vmatprep.subr.bf16.mxu0 0
        %706 = vmatpush2.bf16.msra.mxu0 0
        %707 = vmatprep.subr.bf16.mxu0 0
        %708 = vmatpush2.bf16.msra.mxu0 0
        %709 = vmatprep.subr.bf16.mxu0 0
        %710 = vmatpush2.bf16.msra.mxu0 0
        %711 = vmatprep.subr.bf16.mxu0 0
        %712 = vmatpush2.bf16.msra.mxu0 0
        %713 = vmatprep.subr.bf16.mxu0 0
        %714 = vmatpush2.bf16.msra.mxu0 0
        %715 = vmatprep.subr.bf16.mxu0 0
        %716 = vmatpush2.bf16.msra.mxu0 0
        %717 = vmatprep.subr.bf16.mxu0 0
        %718 = vmatpush2.bf16.msra.mxu0 0
        %719 = vmatprep.mubr.bf16.mxu0 0
        %720 = vmatmul.mubr.bf16.gmra.mxu0 %v685
        %v721 = vpop.f32.mrf.mxu0
        %v722 = vadd.f32 %v658, %v721
        %v723 = vpop.f32.mrf.mxu0
        %v724 = vpop.f32.mrf.mxu0
        %v725 = vpop.f32.mrf.mxu0
        %726 = vdwg.mxu0
        %v727 = vld [vmem:[#allocation3] sm:$0x1]
        %v728 = vld [vmem:[#allocation6] sm:$0x1]
        %v729 = vsel %vm683, %v722, 0.0
        %730 = vadd.xlane.f32.xlu0 %v729
        %v731 = vpop.xlane.xlu0 %730
        %v732 = vrcp.pop 64.0
        %v733 = vmul.f32 %v731, %v732
        %v734 = vsub.f32 %v722, %v733
        %v735 = vmul.f32 %v734, %v734
        %v736 = vsel %vm683, %v735, 0.0
        %737 = vadd.xlane.f32.xlu0 %v736
        %v738 = vpop.xlane.xlu0 %737
        %v739 = vmul.f32 %v738, %v732
        %v740 = vadd.f32 %v739, 1e-12
        %v741 = vrsqrt.pop %v740
        %v742 = vmul.f32 %v734, %v741
        %v744 = vlaneseq
        %v745 = vshrl.u32 %v744, 7
        %v746 = vsub.s32 0, %v745
        %v747 = vrot.slane %v727, %v746
        %v749 = vmul.f32 %v742, %v747
        %v751 = vlaneseq
        %v752 = vshrl.u32 %v751, 7
        %v753 = vsub.s32 0, %v752
        %v754 = vrot.slane %v728, %v753
        %v756 = vadd.f32 %v749, %v754
        %v757 = vld [vmem:[%s638] sm:$0x1]
        %vm758 = vcmp.gt.f32.partialorder %v757, 0.5
        %v759 = vsel %vm758, 0.0, -1e+09
        %v760 = vpack.c.bf16 %v756, %v756
        %v761 = vld [vmem:[%s6] sm:$0xff]
        %v762 = vld [vmem:[%s6 + $0x8] sm:$0xff]
        %v763 = vld [vmem:[%s6 + $0x10] sm:$0xff]
        %v764 = vld [vmem:[%s6 + $0x18] sm:$0xff]
        %v765 = vld [vmem:[%s6 + $0x20] sm:$0xff]
        %v766 = vld [vmem:[%s6 + $0x28] sm:$0xff]
        %v767 = vld [vmem:[%s6 + $0x30] sm:$0xff]
        %v768 = vld [vmem:[%s6 + $0x38] sm:$0xff]
        %v769 = vld [vmem:[%s7] sm:$0x3]
        %v771 = vlaneseq
        %v772 = vshrl.u32 %v771, 7
        %v773 = vsub.s32 0, %v772
        %v774 = vrot.slane %v769, %v773
        %v775 = vlaneseq
        %v776 = vshrl.u32 %v775, 7
        %v777 = vsub.s32 1, %v776
        %v778 = vrot.slane %v769, %v777
        %v789 = vunpack.c.l.b16 %v761
        %v790 = vunpack.c.h.b16 %v761
        %v791 = vunpack.c.l.b16 %v762
        %v792 = vunpack.c.h.b16 %v762
        %v793 = vunpack.c.l.b16 %v763
        %v794 = vunpack.c.h.b16 %v763
        %v795 = vunpack.c.l.b16 %v764
        %v796 = vunpack.c.h.b16 %v764
        %v797 = vunpack.c.l.b16 %v765
        %v798 = vunpack.c.h.b16 %v765
        %v799 = vunpack.c.l.b16 %v766
        %v800 = vunpack.c.h.b16 %v766
        %v801 = vunpack.c.l.b16 %v767
        %v802 = vunpack.c.h.b16 %v767
        %v803 = vunpack.c.l.b16 %v768
        %v804 = vunpack.c.h.b16 %v768
        %v805 = vpack.c.b16 %v791, %v789
        %v806 = vpack.c.b16 %v792, %v790
        %v807 = vpack.c.b16 %v795, %v793
        %v808 = vpack.c.b16 %v796, %v794
        %v809 = vpack.c.b16 %v799, %v797
        %v810 = vpack.c.b16 %v800, %v798
        %v811 = vpack.c.b16 %v803, %v801
        %v812 = vpack.c.b16 %v804, %v802
        %v822 = vsel %vm683, %v760, 0
        %824 = vmatprep.subr.bf16.mxu0 0
        %825 = vmatpush1.bf16.msra.mxu0 0
        %826 = vmatprep.subr.bf16.mxu0 0
        %827 = vmatpush1.bf16.msra.mxu0 0
        %828 = vmatprep.subr.bf16.mxu0 0
        %829 = vmatpush1.bf16.msra.mxu0 0
        %830 = vmatprep.subr.bf16.mxu0 0
        %831 = vmatpush1.bf16.msra.mxu0 0
        %832 = vmatprep.subr.bf16.mxu0 %v812
        %833 = vmatpush1.bf16.msra.mxu0 %v811
        %834 = vmatprep.subr.bf16.mxu0 %v810
        %835 = vmatpush1.bf16.msra.mxu0 %v809
        %836 = vmatprep.subr.bf16.mxu0 %v808
        %837 = vmatpush1.bf16.msra.mxu0 %v807
        %838 = vmatprep.subr.bf16.mxu0 %v806
        %839 = vmatpush1.bf16.msra.mxu0 %v805
        %840 = vmatprep.subr.bf16.mxu0 0
        %841 = vmatpush2.bf16.msra.mxu0 0
        %842 = vmatprep.subr.bf16.mxu0 0
        %843 = vmatpush2.bf16.msra.mxu0 0
        %844 = vmatprep.subr.bf16.mxu0 0
        %845 = vmatpush2.bf16.msra.mxu0 0
        %846 = vmatprep.subr.bf16.mxu0 0
        %847 = vmatpush2.bf16.msra.mxu0 0
        %848 = vmatprep.subr.bf16.mxu0 0
        %849 = vmatpush2.bf16.msra.mxu0 0
        %850 = vmatprep.subr.bf16.mxu0 0
        %851 = vmatpush2.bf16.msra.mxu0 0
        %852 = vmatprep.subr.bf16.mxu0 0
        %853 = vmatpush2.bf16.msra.mxu0 0
        %854 = vmatprep.subr.bf16.mxu0 0
        %855 = vmatpush2.bf16.msra.mxu0 0
        %856 = vmatprep.mubr.bf16.mxu0 0
        %857 = vmatmul.mubr.bf16.gmra.mxu0 %v822
        %v858 = vpop.f32.mrf.mxu0
        %v859 = vadd.f32 %v774, %v858
        %v860 = vpop.f32.mrf.mxu0
        %v861 = vadd.f32 %v778, %v860
        %v862 = vpop.f32.mrf.mxu0
        %v863 = vpop.f32.mrf.mxu0
        %864 = vdwg.mxu0
        %v865 = vpack.c.bf16 %v859, %v859
        %v866 = vpack.c.bf16 %v861, %v861
        %868 = vrot.lane.b32.xlu0 %v865, 64
        %v869 = vpop.permute.xlu0 %868
        %vm870 = vcmask 261120
        %v872 = vsel %vm870, %v865, 0
        %v875 = vsel %vm870, %v869, 0
        %877 = vmatprep.subr.bf16.mxu0 0
        %878 = vmatpush1.bf16.xpose.msra.mxu0 0
        %879 = vmatprep.subr.bf16.mxu0 0
        %880 = vmatpush1.bf16.xpose.msra.mxu0 0
        %881 = vmatprep.subr.bf16.mxu0 0
        %882 = vmatpush1.bf16.xpose.msra.mxu0 0
        %883 = vmatprep.subr.bf16.mxu0 0
        %884 = vmatpush1.bf16.xpose.msra.mxu0 0
        %885 = vmatprep.subr.bf16.mxu0 0
        %886 = vmatpush1.bf16.xpose.msra.mxu0 0
        %887 = vmatprep.subr.bf16.mxu0 0
        %888 = vmatpush1.bf16.xpose.msra.mxu0 0
        %889 = vmatprep.subr.bf16.mxu0 0
        %890 = vmatpush1.bf16.xpose.msra.mxu0 0
        %891 = vmatprep.subr.bf16.mxu0 0
        %892 = vmatpush1.bf16.xpose.msra.mxu0 %v875
        %893 = vmatprep.subr.bf16.mxu0 0
        %894 = vmatpush2.bf16.xpose.msra.mxu0 0
        %895 = vmatprep.subr.bf16.mxu0 0
        %896 = vmatpush2.bf16.xpose.msra.mxu0 0
        %897 = vmatprep.subr.bf16.mxu0 0
        %898 = vmatpush2.bf16.xpose.msra.mxu0 0
        %899 = vmatprep.subr.bf16.mxu0 0
        %900 = vmatpush2.bf16.xpose.msra.mxu0 0
        %901 = vmatprep.subr.bf16.mxu0 0
        %902 = vmatpush2.bf16.xpose.msra.mxu0 0
        %903 = vmatprep.subr.bf16.mxu0 0
        %904 = vmatpush2.bf16.xpose.msra.mxu0 0
        %905 = vmatprep.subr.bf16.mxu0 0
        %906 = vmatpush2.bf16.xpose.msra.mxu0 0
        %907 = vmatprep.subr.bf16.mxu0 0
        %908 = vmatpush2.bf16.xpose.msra.mxu0 0
        %909 = vmatprep.mubr.bf16.mxu0 0
        %910 = vmatmul.mubr.bf16.gmra.mxu0 %v872
        %v911 = vpop.f32.mrf.mxu0
        %v912 = vadd.f32 0.0, %v911
        %v913 = vpop.f32.mrf.mxu0
        %v914 = vpop.f32.mrf.mxu0
        %v915 = vpop.f32.mrf.mxu0
        %916 = vdwg.mxu0
        %v917 = vmul.f32 %v912, 0.17677669
        %v919 = vlaneseq
        %v920 = vshrl.u32 %v919, 7
        %v921 = vsub.s32 0, %v920
        %v922 = vrot.slane %v759, %v921
        %v924 = vadd.f32 %v917, %v922
        %vm925 = vcmask 64512
        %v926 = vsel %vm925, %v924, -inf
        %927 = vmax.xlane.f32.xlu0 %v926
        %v928 = vpop.xlane.xlu0 %927
        %v929 = vsub.f32 %v924, %v928
        %v930 = vmul.f32 %v929, 1.442695
        %v931 = vpow.pop %v930
        %v932 = vsel %vm925, %v931, 0.0
        %933 = vadd.xlane.f32.xlu0 %v932
        %v934 = vpop.xlane.xlu0 %933
        %v935 = vrcp.pop %v934
        %v936 = vmul.f32 %v931, %v935
        %v937 = vpack.c.bf16 %v936, %v936
        %v939 = vsel %vm925, %v937, 0
        %vm941 = vcmask 1043456
        %v943 = vsel %vm941, %v866, 0
        %945 = vmatprep.subr.bf16.mxu0 0
        %946 = vmatpush1.bf16.msra.mxu0 0
        %947 = vmatprep.subr.bf16.mxu0 0
        %948 = vmatpush1.bf16.msra.mxu0 0
        %949 = vmatprep.subr.bf16.mxu0 0
        %950 = vmatpush1.bf16.msra.mxu0 0
        %951 = vmatprep.subr.bf16.mxu0 0
        %952 = vmatpush1.bf16.msra.mxu0 0
        %953 = vmatprep.subr.bf16.mxu0 0
        %954 = vmatpush1.bf16.msra.mxu0 0
        %955 = vmatprep.subr.bf16.mxu0 0
        %956 = vmatpush1.bf16.msra.mxu0 0
        %957 = vmatprep.subr.bf16.mxu0 0
        %958 = vmatpush1.bf16.msra.mxu0 0
        %959 = vmatprep.subr.bf16.mxu0 0
        %960 = vmatpush1.bf16.msra.mxu0 %v943
        %961 = vmatprep.subr.bf16.mxu0 0
        %962 = vmatpush2.bf16.msra.mxu0 0
        %963 = vmatprep.subr.bf16.mxu0 0
        %964 = vmatpush2.bf16.msra.mxu0 0
        %965 = vmatprep.subr.bf16.mxu0 0
        %966 = vmatpush2.bf16.msra.mxu0 0
        %967 = vmatprep.subr.bf16.mxu0 0
        %968 = vmatpush2.bf16.msra.mxu0 0
        %969 = vmatprep.subr.bf16.mxu0 0
        %970 = vmatpush2.bf16.msra.mxu0 0
        %971 = vmatprep.subr.bf16.mxu0 0
        %972 = vmatpush2.bf16.msra.mxu0 0
        %973 = vmatprep.subr.bf16.mxu0 0
        %974 = vmatpush2.bf16.msra.mxu0 0
        %975 = vmatprep.subr.bf16.mxu0 0
        %976 = vmatpush2.bf16.msra.mxu0 0
        %977 = vmatprep.mubr.bf16.mxu0 0
        %978 = vmatmul.mubr.bf16.gmra.mxu0 %v939
        %v979 = vpop.f32.mrf.mxu0
        %v980 = vadd.f32 0.0, %v979
        %v981 = vpop.f32.mrf.mxu0
        %v982 = vpop.f32.mrf.mxu0
        %v983 = vpop.f32.mrf.mxu0
        %984 = vdwg.mxu0
        %985 = vst.msk [vmem:[#allocation2] sm:$0xff] %vm870, %v980
        %986 = vrot.lane.b32.xlu0 %v865, 96
        %v987 = vpop.permute.xlu0 %986
        %988 = vrot.lane.b32.xlu0 %v865, 32
        %v989 = vpop.permute.xlu0 %988
        %v991 = vsel %vm870, %v987, 0
        %v994 = vsel %vm870, %v989, 0
        %996 = vmatprep.subr.bf16.mxu0 0
        %997 = vmatpush1.bf16.xpose.msra.mxu0 0
        %998 = vmatprep.subr.bf16.mxu0 0
        %999 = vmatpush1.bf16.xpose.msra.mxu0 0
        %1000 = vmatprep.subr.bf16.mxu0 0
        %1001 = vmatpush1.bf16.xpose.msra.mxu0 0
        %1002 = vmatprep.subr.bf16.mxu0 0
        %1003 = vmatpush1.bf16.xpose.msra.mxu0 0
        %1004 = vmatprep.subr.bf16.mxu0 0
        %1005 = vmatpush1.bf16.xpose.msra.mxu0 0
        %1006 = vmatprep.subr.bf16.mxu0 0
        %1007 = vmatpush1.bf16.xpose.msra.mxu0 0
        %1008 = vmatprep.subr.bf16.mxu0 0
        %1009 = vmatpush1.bf16.xpose.msra.mxu0 0
        %1010 = vmatprep.subr.bf16.mxu0 0
        %1011 = vmatpush1.bf16.xpose.msra.mxu0 %v994
        %1012 = vmatprep.subr.bf16.mxu0 0
        %1013 = vmatpush2.bf16.xpose.msra.mxu0 0
        %1014 = vmatprep.subr.bf16.mxu0 0
        %1015 = vmatpush2.bf16.xpose.msra.mxu0 0
        %1016 = vmatprep.subr.bf16.mxu0 0
        %1017 = vmatpush2.bf16.xpose.msra.mxu0 0
        %1018 = vmatprep.subr.bf16.mxu0 0
        %1019 = vmatpush2.bf16.xpose.msra.mxu0 0
        %1020 = vmatprep.subr.bf16.mxu0 0
        %1021 = vmatpush2.bf16.xpose.msra.mxu0 0
        %1022 = vmatprep.subr.bf16.mxu0 0
        %1023 = vmatpush2.bf16.xpose.msra.mxu0 0
        %1024 = vmatprep.subr.bf16.mxu0 0
        %1025 = vmatpush2.bf16.xpose.msra.mxu0 0
        %1026 = vmatprep.subr.bf16.mxu0 0
        %1027 = vmatpush2.bf16.xpose.msra.mxu0 0
        %1028 = vmatprep.mubr.bf16.mxu0 0
        %1029 = vmatmul.mubr.bf16.gmra.mxu0 %v991
        %v1030 = vpop.f32.mrf.mxu0
        %v1031 = vadd.f32 0.0, %v1030
        %v1032 = vpop.f32.mrf.mxu0
        %v1033 = vpop.f32.mrf.mxu0
        %v1034 = vpop.f32.mrf.mxu0
        %1035 = vdwg.mxu0
        %v1036 = vmul.f32 %v1031, 0.17677669
        %v1037 = vadd.f32 %v1036, %v922
        %v1038 = vsel %vm925, %v1037, -inf
        %1039 = vmax.xlane.f32.xlu0 %v1038
        %v1040 = vpop.xlane.xlu0 %1039
        %v1041 = vsub.f32 %v1037, %v1040
        %v1042 = vmul.f32 %v1041, 1.442695
        %v1043 = vpow.pop %v1042
        %v1044 = vsel %vm925, %v1043, 0.0
        %1045 = vadd.xlane.f32.xlu0 %v1044
        %v1046 = vpop.xlane.xlu0 %1045
        %v1047 = vrcp.pop %v1046
        %v1048 = vmul.f32 %v1043, %v1047
        %v1049 = vpack.c.bf16 %v1048, %v1048
        %1051 = vrot.lane.b32.xlu0 %v866, 96
        %v1052 = vpop.permute.xlu0 %1051
        %v1054 = vsel %vm925, %v1049, 0
        %v1057 = vsel %vm941, %v1052, 0
        %1059 = vmatprep.subr.bf16.mxu0 0
        %1060 = vmatpush1.bf16.msra.mxu0 0
        %1061 = vmatprep.subr.bf16.mxu0 0
        %1062 = vmatpush1.bf16.msra.mxu0 0
        %1063 = vmatprep.subr.bf16.mxu0 0
        %1064 = vmatpush1.bf16.msra.mxu0 0
        %1065 = vmatprep.subr.bf16.mxu0 0
        %1066 = vmatpush1.bf16.msra.mxu0 0
        %1067 = vmatprep.subr.bf16.mxu0 0
        %1068 = vmatpush1.bf16.msra.mxu0 0
        %1069 = vmatprep.subr.bf16.mxu0 0
        %1070 = vmatpush1.bf16.msra.mxu0 0
        %1071 = vmatprep.subr.bf16.mxu0 0
        %1072 = vmatpush1.bf16.msra.mxu0 0
        %1073 = vmatprep.subr.bf16.mxu0 0
        %1074 = vmatpush1.bf16.msra.mxu0 %v1057
        %1075 = vmatprep.subr.bf16.mxu0 0
        %1076 = vmatpush2.bf16.msra.mxu0 0
        %1077 = vmatprep.subr.bf16.mxu0 0
        %1078 = vmatpush2.bf16.msra.mxu0 0
        %1079 = vmatprep.subr.bf16.mxu0 0
        %1080 = vmatpush2.bf16.msra.mxu0 0
        %1081 = vmatprep.subr.bf16.mxu0 0
        %1082 = vmatpush2.bf16.msra.mxu0 0
        %1083 = vmatprep.subr.bf16.mxu0 0
        %1084 = vmatpush2.bf16.msra.mxu0 0
        %1085 = vmatprep.subr.bf16.mxu0 0
        %1086 = vmatpush2.bf16.msra.mxu0 0
        %1087 = vmatprep.subr.bf16.mxu0 0
        %1088 = vmatpush2.bf16.msra.mxu0 0
        %1089 = vmatprep.subr.bf16.mxu0 0
        %1090 = vmatpush2.bf16.msra.mxu0 0
        %1091 = vmatprep.mubr.bf16.mxu0 0
        %1092 = vmatmul.mubr.bf16.gmra.mxu0 %v1054
        %v1093 = vpop.f32.mrf.mxu0
        %v1094 = vadd.f32 0.0, %v1093
        %v1095 = vpop.f32.mrf.mxu0
        %v1096 = vpop.f32.mrf.mxu0
        %v1097 = vpop.f32.mrf.mxu0
        %1098 = vdwg.mxu0
        %1100 = vrot.lane.b32.xlu0 %v1094, 32
        %v1101 = vpop.permute.xlu0 %1100
        %vm1103 = vcmask 523520
        %1104 = vst.msk [vmem:[#allocation2] sm:$0xff] %vm1103, %v1101
        %v1105 = vld [vmem:[#allocation2] sm:$0xff]
        %v1106 = vpack.c.bf16 %v1105, %v1105
        %v1107 = vld [vmem:[%s8] sm:$0xf]
        %v1108 = vld [vmem:[%s8 + $0x4] sm:$0xf]
        %v1109 = vld [vmem:[%s8 + $0x8] sm:$0xf]
        %v1110 = vld [vmem:[%s8 + $0xc] sm:$0xf]
        %v1111 = vld [vmem:[%s8 + $0x10] sm:$0xf]
        %v1112 = vld [vmem:[%s8 + $0x14] sm:$0xf]
        %v1113 = vld [vmem:[%s8 + $0x18] sm:$0xf]
        %v1114 = vld [vmem:[%s8 + $0x1c] sm:$0xf]
        %v1115 = vld [vmem:[%s9] sm:$0x1]
        %v1117 = vlaneseq
        %v1118 = vshrl.u32 %v1117, 7
        %v1119 = vsub.s32 0, %v1118
        %v1120 = vrot.slane %v1115, %v1119
        %v1130 = vunpack.c.l.b16 %v1107
        %v1131 = vunpack.c.l.b16 %v1108
        %v1132 = vunpack.c.l.b16 %v1109
        %v1133 = vunpack.c.l.b16 %v1110
        %v1134 = vunpack.c.l.b16 %v1111
        %v1135 = vunpack.c.l.b16 %v1112
        %v1136 = vunpack.c.l.b16 %v1113
        %v1137 = vunpack.c.l.b16 %v1114
        %v1138 = vpack.c.b16 %v1131, %v1130
        %v1139 = vpack.c.b16 %v1133, %v1132
        %v1140 = vpack.c.b16 %v1135, %v1134
        %v1141 = vpack.c.b16 %v1137, %v1136
        %v1147 = vsel %vm683, %v1106, 0
        %1149 = vmatprep.subr.bf16.mxu0 0
        %1150 = vmatpush1.bf16.msra.mxu0 0
        %1151 = vmatprep.subr.bf16.mxu0 0
        %1152 = vmatpush1.bf16.msra.mxu0 0
        %1153 = vmatprep.subr.bf16.mxu0 0
        %1154 = vmatpush1.bf16.msra.mxu0 0
        %1155 = vmatprep.subr.bf16.mxu0 0
        %1156 = vmatpush1.bf16.msra.mxu0 0
        %1157 = vmatprep.subr.bf16.mxu0 0
        %1158 = vmatpush1.bf16.msra.mxu0 %v1141
        %1159 = vmatprep.subr.bf16.mxu0 0
        %1160 = vmatpush1.bf16.msra.mxu0 %v1140
        %1161 = vmatprep.subr.bf16.mxu0 0
        %1162 = vmatpush1.bf16.msra.mxu0 %v1139
        %1163 = vmatprep.subr.bf16.mxu0 0
        %1164 = vmatpush1.bf16.msra.mxu0 %v1138
        %1165 = vmatprep.subr.bf16.mxu0 0
        %1166 = vmatpush2.bf16.msra.mxu0 0
        %1167 = vmatprep.subr.bf16.mxu0 0
        %1168 = vmatpush2.bf16.msra.mxu0 0
        %1169 = vmatprep.subr.bf16.mxu0 0
        %1170 = vmatpush2.bf16.msra.mxu0 0
        %1171 = vmatprep.subr.bf16.mxu0 0
        %1172 = vmatpush2.bf16.msra.mxu0 0
        %1173 = vmatprep.subr.bf16.mxu0 0
        %1174 = vmatpush2.bf16.msra.mxu0 0
        %1175 = vmatprep.subr.bf16.mxu0 0
        %1176 = vmatpush2.bf16.msra.mxu0 0
        %1177 = vmatprep.subr.bf16.mxu0 0
        %1178 = vmatpush2.bf16.msra.mxu0 0
        %1179 = vmatprep.subr.bf16.mxu0 0
        %1180 = vmatpush2.bf16.msra.mxu0 0
        %1181 = vmatprep.mubr.bf16.mxu0 0
        %1182 = vmatmul.mubr.bf16.gmra.mxu0 %v1147
        %v1183 = vpop.f32.mrf.mxu0
        %v1184 = vadd.f32 %v1120, %v1183
        %v1185 = vpop.f32.mrf.mxu0
        %v1186 = vpop.f32.mrf.mxu0
        %v1187 = vpop.f32.mrf.mxu0
        %1188 = vdwg.mxu0
        %v1189 = vadd.f32 %v756, %v1184
        %v1190 = vld [vmem:[%s10] sm:$0x1]
        %v1191 = vld [vmem:[%s11] sm:$0x1]
        %v1192 = vsel %vm683, %v1189, 0.0
        %1193 = vadd.xlane.f32.xlu0 %v1192
        %v1194 = vpop.xlane.xlu0 %1193
        %v1195 = vmul.f32 %v1194, %v732
        %v1196 = vsub.f32 %v1189, %v1195
        %v1197 = vmul.f32 %v1196, %v1196
        %v1198 = vsel %vm683, %v1197, 0.0
        %1199 = vadd.xlane.f32.xlu0 %v1198
        %v1200 = vpop.xlane.xlu0 %1199
        %v1201 = vmul.f32 %v1200, %v732
        %v1202 = vadd.f32 %v1201, 1e-12
        %v1203 = vrsqrt.pop %v1202
        %v1204 = vmul.f32 %v1196, %v1203
        %v1206 = vlaneseq
        %v1207 = vshrl.u32 %v1206, 7
        %v1208 = vsub.s32 0, %v1207
        %v1209 = vrot.slane %v1190, %v1208
        %v1211 = vmul.f32 %v1204, %v1209
        %v1213 = vlaneseq
        %v1214 = vshrl.u32 %v1213, 7
        %v1215 = vsub.s32 0, %v1214
        %v1216 = vrot.slane %v1191, %v1215
        %v1218 = vadd.f32 %v1211, %v1216
        %v1219 = vpack.c.bf16 %v1218, %v1218
        %v1220 = vld [vmem:[#allocation8] sm:$0xf]
        %v1221 = vld [vmem:[#allocation8 + $0x4] sm:$0xf]
        %v1222 = vld [vmem:[#allocation8 + $0x8] sm:$0xf]
        %v1223 = vld [vmem:[#allocation8 + $0xc] sm:$0xf]
        %v1224 = vld [vmem:[#allocation8 + $0x10] sm:$0xf]
        %v1225 = vld [vmem:[#allocation8 + $0x14] sm:$0xf]
        %v1226 = vld [vmem:[#allocation8 + $0x18] sm:$0xf]
        %v1227 = vld [vmem:[#allocation8 + $0x1c] sm:$0xf]
        %v1228 = vld [vmem:[%s13] sm:$0x1]
        %v1230 = vlaneseq
        %v1231 = vshrl.u32 %v1230, 7
        %v1232 = vsub.s32 0, %v1231
        %v1233 = vrot.slane %v1228, %v1232
        %v1243 = vunpack.c.l.b16 %v1220
        %v1244 = vunpack.c.l.b16 %v1221
        %v1245 = vunpack.c.l.b16 %v1222
        %v1246 = vunpack.c.l.b16 %v1223
        %v1247 = vunpack.c.l.b16 %v1224
        %v1248 = vunpack.c.l.b16 %v1225
        %v1249 = vunpack.c.l.b16 %v1226
        %v1250 = vunpack.c.l.b16 %v1227
        %v1251 = vpack.c.b16 %v1244, %v1243
        %v1252 = vpack.c.b16 %v1246, %v1245
        %v1253 = vpack.c.b16 %v1248, %v1247
        %v1254 = vpack.c.b16 %v1250, %v1249
        %v1260 = vsel %vm683, %v1219, 0
        %1262 = vmatprep.subr.bf16.mxu0 0
        %1263 = vmatpush1.bf16.msra.mxu0 0
        %1264 = vmatprep.subr.bf16.mxu0 0
        %1265 = vmatpush1.bf16.msra.mxu0 0
        %1266 = vmatprep.subr.bf16.mxu0 0
        %1267 = vmatpush1.bf16.msra.mxu0 0
        %1268 = vmatprep.subr.bf16.mxu0 0
        %1269 = vmatpush1.bf16.msra.mxu0 0
        %1270 = vmatprep.subr.bf16.mxu0 0
        %1271 = vmatpush1.bf16.msra.mxu0 %v1254
        %1272 = vmatprep.subr.bf16.mxu0 0
        %1273 = vmatpush1.bf16.msra.mxu0 %v1253
        %1274 = vmatprep.subr.bf16.mxu0 0
        %1275 = vmatpush1.bf16.msra.mxu0 %v1252
        %1276 = vmatprep.subr.bf16.mxu0 0
        %1277 = vmatpush1.bf16.msra.mxu0 %v1251
        %1278 = vmatprep.subr.bf16.mxu0 0
        %1279 = vmatpush2.bf16.msra.mxu0 0
        %1280 = vmatprep.subr.bf16.mxu0 0
        %1281 = vmatpush2.bf16.msra.mxu0 0
        %1282 = vmatprep.subr.bf16.mxu0 0
        %1283 = vmatpush2.bf16.msra.mxu0 0
        %1284 = vmatprep.subr.bf16.mxu0 0
        %1285 = vmatpush2.bf16.msra.mxu0 0
        %1286 = vmatprep.subr.bf16.mxu0 0
        %1287 = vmatpush2.bf16.msra.mxu0 0
        %1288 = vmatprep.subr.bf16.mxu0 0
        %1289 = vmatpush2.bf16.msra.mxu0 0
        %1290 = vmatprep.subr.bf16.mxu0 0
        %1291 = vmatpush2.bf16.msra.mxu0 0
        %1292 = vmatprep.subr.bf16.mxu0 0
        %1293 = vmatpush2.bf16.msra.mxu0 0
        %1294 = vmatprep.mubr.bf16.mxu0 0
        %1295 = vmatmul.mubr.bf16.gmra.mxu0 %v1260
        %v1296 = vpop.f32.mrf.mxu0
        %v1297 = vadd.f32 %v1233, %v1296
        %v1298 = vpop.f32.mrf.mxu0
        %v1299 = vpop.f32.mrf.mxu0
        %v1300 = vpop.f32.mrf.mxu0
        %1301 = vdwg.mxu0
        %v1302 = vmul.f32 %v1297, 0.70710677
        %v1303 = vand.u32 2147483647, %v1302
        %v1304 = vmul.f32 %v1303, 0.3275911
        %v1305 = vadd.f32 %v1304, 1.0
        %v1306 = vrcp.pop %v1305
        %v1307 = vmul.f32 1.0, %v1306
        %v1308 = vmul.f32 %v1307, 1.0614054
        %v1309 = vsub.f32 %v1308, 1.4531521
        %v1310 = vmul.f32 %v1309, %v1307
        %v1311 = vadd.f32 %v1310, 1.4214138
        %v1312 = vmul.f32 %v1311, %v1307
        %v1313 = vsub.f32 %v1312, 0.28449672
        %v1314 = vmul.f32 %v1313, %v1307
        %v1315 = vadd.f32 %v1314, 0.2548296
        %v1316 = vmul.f32 %v1315, %v1307
        %v1317 = vsub.f32 0.0, %v1303
        %v1318 = vmul.f32 %v1317, %v1303
        %v1319 = vmul.f32 %v1318, 1.442695
        %v1320 = vpow.pop %v1319
        %v1321 = vmul.f32 %v1316, %v1320
        %v1322 = vsub.f32 1.0, %v1321
        %vm1323 = vcmp.ge.f32.partialorder %v1302, 0.0
        %v1324 = vsub.f32 0.0, %v1322
        %v1325 = vsel %vm1323, %v1322, %v1324
        %v1326 = vmul.f32 %v1297, 0.5
        %v1327 = vadd.f32 %v1325, 1.0
        %v1328 = vmul.f32 %v1326, %v1327
        %v1329 = vpack.c.bf16 %v1328, %v1328
        %v1330 = vld [vmem:[%s14] sm:$0xf]
        %v1331 = vld [vmem:[%s14 + $0x4] sm:$0xf]
        %v1332 = vld [vmem:[%s14 + $0x8] sm:$0xf]
        %v1333 = vld [vmem:[%s14 + $0xc] sm:$0xf]
        %v1334 = vld [vmem:[%s14 + $0x10] sm:$0xf]
        %v1335 = vld [vmem:[%s14 + $0x14] sm:$0xf]
        %v1336 = vld [vmem:[%s14 + $0x18] sm:$0xf]
        %v1337 = vld [vmem:[%s14 + $0x1c] sm:$0xf]
        %v1338 = vld [vmem:[%s14 + $0x20] sm:$0xf]
        %v1339 = vld [vmem:[%s14 + $0x24] sm:$0xf]
        %v1340 = vld [vmem:[%s14 + $0x28] sm:$0xf]
        %v1341 = vld [vmem:[%s14 + $0x2c] sm:$0xf]
        %v1342 = vld [vmem:[%s14 + $0x30] sm:$0xf]
        %v1343 = vld [vmem:[%s14 + $0x34] sm:$0xf]
        %v1344 = vld [vmem:[%s14 + $0x38] sm:$0xf]
        %v1345 = vld [vmem:[%s14 + $0x3c] sm:$0xf]
        %v1346 = vld [vmem:[%s15] sm:$0x1]
        %v1348 = vlaneseq
        %v1349 = vshrl.u32 %v1348, 7
        %v1350 = vsub.s32 0, %v1349
        %v1351 = vrot.slane %v1346, %v1350
        %v1369 = vunpack.c.l.b16 %v1330
        %v1370 = vunpack.c.l.b16 %v1331
        %v1371 = vunpack.c.l.b16 %v1332
        %v1372 = vunpack.c.l.b16 %v1333
        %v1373 = vunpack.c.l.b16 %v1334
        %v1374 = vunpack.c.l.b16 %v1335
        %v1375 = vunpack.c.l.b16 %v1336
        %v1376 = vunpack.c.l.b16 %v1337
        %v1377 = vunpack.c.l.b16 %v1338
        %v1378 = vunpack.c.l.b16 %v1339
        %v1379 = vunpack.c.l.b16 %v1340
        %v1380 = vunpack.c.l.b16 %v1341
        %v1381 = vunpack.c.l.b16 %v1342
        %v1382 = vunpack.c.l.b16 %v1343
        %v1383 = vunpack.c.l.b16 %v1344
        %v1384 = vunpack.c.l.b16 %v1345
        %v1385 = vpack.c.b16 %v1370, %v1369
        %v1386 = vpack.c.b16 %v1372, %v1371
        %v1387 = vpack.c.b16 %v1374, %v1373
        %v1388 = vpack.c.b16 %v1376, %v1375
        %v1389 = vpack.c.b16 %v1378, %v1377
        %v1390 = vpack.c.b16 %v1380, %v1379
        %v1391 = vpack.c.b16 %v1382, %v1381
        %v1392 = vpack.c.b16 %v1384, %v1383
        %1401 = vmatprep.subr.bf16.mxu0 0
        %1402 = vmatpush1.bf16.msra.mxu0 %v1392
        %1403 = vmatprep.subr.bf16.mxu0 0
        %1404 = vmatpush1.bf16.msra.mxu0 %v1391
        %1405 = vmatprep.subr.bf16.mxu0 0
        %1406 = vmatpush1.bf16.msra.mxu0 %v1390
        %1407 = vmatprep.subr.bf16.mxu0 0
        %1408 = vmatpush1.bf16.msra.mxu0 %v1389
        %1409 = vmatprep.subr.bf16.mxu0 0
        %1410 = vmatpush1.bf16.msra.mxu0 %v1388
        %1411 = vmatprep.subr.bf16.mxu0 0
        %1412 = vmatpush1.bf16.msra.mxu0 %v1387
        %1413 = vmatprep.subr.bf16.mxu0 0
        %1414 = vmatpush1.bf16.msra.mxu0 %v1386
        %1415 = vmatprep.subr.bf16.mxu0 0
        %1416 = vmatpush1.bf16.msra.mxu0 %v1385
        %1417 = vmatprep.subr.bf16.mxu0 0
        %1418 = vmatpush2.bf16.msra.mxu0 0
        %1419 = vmatprep.subr.bf16.mxu0 0
        %1420 = vmatpush2.bf16.msra.mxu0 0
        %1421 = vmatprep.subr.bf16.mxu0 0
        %1422 = vmatpush2.bf16.msra.mxu0 0
        %1423 = vmatprep.subr.bf16.mxu0 0
        %1424 = vmatpush2.bf16.msra.mxu0 0
        %1425 = vmatprep.subr.bf16.mxu0 0
        %1426 = vmatpush2.bf16.msra.mxu0 0
        %1427 = vmatprep.subr.bf16.mxu0 0
        %1428 = vmatpush2.bf16.msra.mxu0 0
        %1429 = vmatprep.subr.bf16.mxu0 0
        %1430 = vmatpush2.bf16.msra.mxu0 0
        %1431 = vmatprep.subr.bf16.mxu0 0
        %1432 = vmatpush2.bf16.msra.mxu0 0
        %1433 = vmatprep.mubr.bf16.mxu0 0
        %1434 = vmatmul.mubr.bf16.gmra.mxu0 %v1329
        %v1435 = vpop.f32.mrf.mxu0
        %v1436 = vadd.f32 %v1351, %v1435
        %v1437 = vpop.f32.mrf.mxu0
        %v1438 = vpop.f32.mrf.mxu0
        %v1439 = vpop.f32.mrf.mxu0
        %1440 = vdwg.mxu0
        %v1441 = vadd.f32 %v1218, %v1436
        %v1442 = vld [vmem:[%s16] sm:$0x1]
        %v1443 = vld [vmem:[#allocation9] sm:$0x1]
        %v1444 = vsel %vm683, %v1441, 0.0
        %1445 = vadd.xlane.f32.xlu0 %v1444
        %v1446 = vpop.xlane.xlu0 %1445
        %v1447 = vmul.f32 %v1446, %v732
        %v1448 = vsub.f32 %v1441, %v1447
        %v1449 = vmul.f32 %v1448, %v1448
        %v1450 = vsel %vm683, %v1449, 0.0
        %1451 = vadd.xlane.f32.xlu0 %v1450
        %v1452 = vpop.xlane.xlu0 %1451
        %v1453 = vmul.f32 %v1452, %v732
        %v1454 = vadd.f32 %v1453, 1e-12
        %v1455 = vrsqrt.pop %v1454
        %v1456 = vmul.f32 %v1448, %v1455
        %v1458 = vlaneseq
        %v1459 = vshrl.u32 %v1458, 7
        %v1460 = vsub.s32 0, %v1459
        %v1461 = vrot.slane %v1442, %v1460
        %v1463 = vmul.f32 %v1456, %v1461
        %v1465 = vlaneseq
        %v1466 = vshrl.u32 %v1465, 7
        %v1467 = vsub.s32 0, %v1466
        %v1468 = vrot.slane %v1443, %v1467
        %v1470 = vadd.f32 %v1463, %v1468
        %v1471 = vpack.c.bf16 %v1470, %v1470
        %s1472 = scalar_lea.vmem %s6, 64
        %v1473 = vld [vmem:[%s1472] sm:$0xff]
        %v1474 = vld [vmem:[%s1472 + $0x8] sm:$0xff]
        %v1475 = vld [vmem:[%s1472 + $0x10] sm:$0xff]
        %v1476 = vld [vmem:[%s1472 + $0x18] sm:$0xff]
        %v1477 = vld [vmem:[%s1472 + $0x20] sm:$0xff]
        %v1478 = vld [vmem:[%s1472 + $0x28] sm:$0xff]
        %v1479 = vld [vmem:[%s1472 + $0x30] sm:$0xff]
        %v1480 = vld [vmem:[%s1472 + $0x38] sm:$0xff]
        %s1481 = scalar_lea.vmem %s7, 2
        %v1482 = vld [vmem:[%s1481] sm:$0x3]
        %v1484 = vlaneseq
        %v1485 = vshrl.u32 %v1484, 7
        %v1486 = vsub.s32 0, %v1485
        %v1487 = vrot.slane %v1482, %v1486
        %v1488 = vlaneseq
        %v1489 = vshrl.u32 %v1488, 7
        %v1490 = vsub.s32 1, %v1489
        %v1491 = vrot.slane %v1482, %v1490
        %v1502 = vunpack.c.l.b16 %v1473
        %v1503 = vunpack.c.h.b16 %v1473
        %v1504 = vunpack.c.l.b16 %v1474
        %v1505 = vunpack.c.h.b16 %v1474
        %v1506 = vunpack.c.l.b16 %v1475
        %v1507 = vunpack.c.h.b16 %v1475
        %v1508 = vunpack.c.l.b16 %v1476
        %v1509 = vunpack.c.h.b16 %v1476
        %v1510 = vunpack.c.l.b16 %v1477
        %v1511 = vunpack.c.h.b16 %v1477
        %v1512 = vunpack.c.l.b16 %v1478
        %v1513 = vunpack.c.h.b16 %v1478
        %v1514 = vunpack.c.l.b16 %v1479
        %v1515 = vunpack.c.h.b16 %v1479
        %v1516 = vunpack.c.l.b16 %v1480
        %v1517 = vunpack.c.h.b16 %v1480
        %v1518 = vpack.c.b16 %v1504, %v1502
        %v1519 = vpack.c.b16 %v1505, %v1503
        %v1520 = vpack.c.b16 %v1508, %v1506
        %v1521 = vpack.c.b16 %v1509, %v1507
        %v1522 = vpack.c.b16 %v1512, %v1510
        %v1523 = vpack.c.b16 %v1513, %v1511
        %v1524 = vpack.c.b16 %v1516, %v1514
        %v1525 = vpack.c.b16 %v1517, %v1515
        %v1535 = vsel %vm683, %v1471, 0
        %1537 = vmatprep.subr.bf16.mxu0 0
        %1538 = vmatpush1.bf16.msra.mxu0 0
        %1539 = vmatprep.subr.bf16.mxu0 0
        %1540 = vmatpush1.bf16.msra.mxu0 0
        %1541 = vmatprep.subr.bf16.mxu0 0
        %1542 = vmatpush1.bf16.msra.mxu0 0
        %1543 = vmatprep.subr.bf16.mxu0 0
        %1544 = vmatpush1.bf16.msra.mxu0 0
        %1545 = vmatprep.subr.bf16.mxu0 %v1525
        %1546 = vmatpush1.bf16.msra.mxu0 %v1524
        %1547 = vmatprep.subr.bf16.mxu0 %v1523
        %1548 = vmatpush1.bf16.msra.mxu0 %v1522
        %1549 = vmatprep.subr.bf16.mxu0 %v1521
        %1550 = vmatpush1.bf16.msra.mxu0 %v1520
        %1551 = vmatprep.subr.bf16.mxu0 %v1519
        %1552 = vmatpush1.bf16.msra.mxu0 %v1518
        %1553 = vmatprep.subr.bf16.mxu0 0
        %1554 = vmatpush2.bf16.msra.mxu0 0
        %1555 = vmatprep.subr.bf16.mxu0 0
        %1556 = vmatpush2.bf16.msra.mxu0 0
        %1557 = vmatprep.subr.bf16.mxu0 0
        %1558 = vmatpush2.bf16.msra.mxu0 0
        %1559 = vmatprep.subr.bf16.mxu0 0
        %1560 = vmatpush2.bf16.msra.mxu0 0
        %1561 = vmatprep.subr.bf16.mxu0 0
        %1562 = vmatpush2.bf16.msra.mxu0 0
        %1563 = vmatprep.subr.bf16.mxu0 0
        %1564 = vmatpush2.bf16.msra.mxu0 0
        %1565 = vmatprep.subr.bf16.mxu0 0
        %1566 = vmatpush2.bf16.msra.mxu0 0
        %1567 = vmatprep.subr.bf16.mxu0 0
        %1568 = vmatpush2.bf16.msra.mxu0 0
        %1569 = vmatprep.mubr.bf16.mxu0 0
        %1570 = vmatmul.mubr.bf16.gmra.mxu0 %v1535
        %v1571 = vpop.f32.mrf.mxu0
        %v1572 = vadd.f32 %v1487, %v1571
        %v1573 = vpop.f32.mrf.mxu0
        %v1574 = vadd.f32 %v1491, %v1573
        %v1575 = vpop.f32.mrf.mxu0
        %v1576 = vpop.f32.mrf.mxu0
        %1577 = vdwg.mxu0
        %v1578 = vpack.c.bf16 %v1572, %v1572
        %v1579 = vpack.c.bf16 %v1574, %v1574
        %1581 = vrot.lane.b32.xlu0 %v1578, 64
        %v1582 = vpop.permute.xlu0 %1581
        %v1584 = vsel %vm870, %v1578, 0
        %v1587 = vsel %vm870, %v1582, 0
        %1589 = vmatprep.subr.bf16.mxu0 0
        %1590 = vmatpush1.bf16.xpose.msra.mxu0 0
        %1591 = vmatprep.subr.bf16.mxu0 0
        %1592 = vmatpush1.bf16.xpose.msra.mxu0 0
        %1593 = vmatprep.subr.bf16.mxu0 0
        %1594 = vmatpush1.bf16.xpose.msra.mxu0 0
        %1595 = vmatprep.subr.bf16.mxu0 0
        %1596 = vmatpush1.bf16.xpose.msra.mxu0 0
        %1597 = vmatprep.subr.bf16.mxu0 0
        %1598 = vmatpush1.bf16.xpose.msra.mxu0 0
        %1599 = vmatprep.subr.bf16.mxu0 0
        %1600 = vmatpush1.bf16.xpose.msra.mxu0 0
        %1601 = vmatprep.subr.bf16.mxu0 0
        %1602 = vmatpush1.bf16.xpose.msra.mxu0 0
        %1603 = vmatprep.subr.bf16.mxu0 0
        %1604 = vmatpush1.bf16.xpose.msra.mxu0 %v1587
        %1605 = vmatprep.subr.bf16.mxu0 0
        %1606 = vmatpush2.bf16.xpose.msra.mxu0 0
        %1607 = vmatprep.subr.bf16.mxu0 0
        %1608 = vmatpush2.bf16.xpose.msra.mxu0 0
        %1609 = vmatprep.subr.bf16.mxu0 0
        %1610 = vmatpush2.bf16.xpose.msra.mxu0 0
        %1611 = vmatprep.subr.bf16.mxu0 0
        %1612 = vmatpush2.bf16.xpose.msra.mxu0 0
        %1613 = vmatprep.subr.bf16.mxu0 0
        %1614 = vmatpush2.bf16.xpose.msra.mxu0 0
        %1615 = vmatprep.subr.bf16.mxu0 0
        %1616 = vmatpush2.bf16.xpose.msra.mxu0 0
        %1617 = vmatprep.subr.bf16.mxu0 0
        %1618 = vmatpush2.bf16.xpose.msra.mxu0 0
        %1619 = vmatprep.subr.bf16.mxu0 0
        %1620 = vmatpush2.bf16.xpose.msra.mxu0 0
        %1621 = vmatprep.mubr.bf16.mxu0 0
        %1622 = vmatmul.mubr.bf16.gmra.mxu0 %v1584
        %v1623 = vpop.f32.mrf.mxu0
        %v1624 = vadd.f32 0.0, %v1623
        %v1625 = vpop.f32.mrf.mxu0
        %v1626 = vpop.f32.mrf.mxu0
        %v1627 = vpop.f32.mrf.mxu0
        %1628 = vdwg.mxu0
        %v1629 = vmul.f32 %v1624, 0.17677669
        %v1630 = vadd.f32 %v1629, %v922
        %v1631 = vsel %vm925, %v1630, -inf
        %1632 = vmax.xlane.f32.xlu0 %v1631
        %v1633 = vpop.xlane.xlu0 %1632
        %v1634 = vsub.f32 %v1630, %v1633
        %v1635 = vmul.f32 %v1634, 1.442695
        %v1636 = vpow.pop %v1635
        %v1637 = vsel %vm925, %v1636, 0.0
        %1638 = vadd.xlane.f32.xlu0 %v1637
        %v1639 = vpop.xlane.xlu0 %1638
        %v1640 = vrcp.pop %v1639
        %v1641 = vmul.f32 %v1636, %v1640
        %v1642 = vpack.c.bf16 %v1641, %v1641
        %v1644 = vsel %vm925, %v1642, 0
        %v1647 = vsel %vm941, %v1579, 0
        %1649 = vmatprep.subr.bf16.mxu0 0
        %1650 = vmatpush1.bf16.msra.mxu0 0
        %1651 = vmatprep.subr.bf16.mxu0 0
        %1652 = vmatpush1.bf16.msra.mxu0 0
        %1653 = vmatprep.subr.bf16.mxu0 0
        %1654 = vmatpush1.bf16.msra.mxu0 0
        %1655 = vmatprep.subr.bf16.mxu0 0
        %1656 = vmatpush1.bf16.msra.mxu0 0
        %1657 = vmatprep.subr.bf16.mxu0 0
        %1658 = vmatpush1.bf16.msra.mxu0 0
        %1659 = vmatprep.subr.bf16.mxu0 0
        %1660 = vmatpush1.bf16.msra.mxu0 0
        %1661 = vmatprep.subr.bf16.mxu0 0
        %1662 = vmatpush1.bf16.msra.mxu0 0
        %1663 = vmatprep.subr.bf16.mxu0 0
        %1664 = vmatpush1.bf16.msra.mxu0 %v1647
        %1665 = vmatprep.subr.bf16.mxu0 0
        %1666 = vmatpush2.bf16.msra.mxu0 0
        %1667 = vmatprep.subr.bf16.mxu0 0
        %1668 = vmatpush2.bf16.msra.mxu0 0
        %1669 = vmatprep.subr.bf16.mxu0 0
        %1670 = vmatpush2.bf16.msra.mxu0 0
        %1671 = vmatprep.subr.bf16.mxu0 0
        %1672 = vmatpush2.bf16.msra.mxu0 0
        %1673 = vmatprep.subr.bf16.mxu0 0
        %1674 = vmatpush2.bf16.msra.mxu0 0
        %1675 = vmatprep.subr.bf16.mxu0 0
        %1676 = vmatpush2.bf16.msra.mxu0 0
        %1677 = vmatprep.subr.bf16.mxu0 0
        %1678 = vmatpush2.bf16.msra.mxu0 0
        %1679 = vmatprep.subr.bf16.mxu0 0
        %1680 = vmatpush2.bf16.msra.mxu0 0
        %1681 = vmatprep.mubr.bf16.mxu0 0
        %1682 = vmatmul.mubr.bf16.gmra.mxu0 %v1644
        %v1683 = vpop.f32.mrf.mxu0
        %v1684 = vadd.f32 0.0, %v1683
        %v1685 = vpop.f32.mrf.mxu0
        %v1686 = vpop.f32.mrf.mxu0
        %v1687 = vpop.f32.mrf.mxu0
        %1688 = vdwg.mxu0
        %1689 = vst.msk [vmem:[#allocation2] sm:$0xff] %vm870, %v1684
        %1690 = vrot.lane.b32.xlu0 %v1578, 96
        %v1691 = vpop.permute.xlu0 %1690
        %1692 = vrot.lane.b32.xlu0 %v1578, 32
        %v1693 = vpop.permute.xlu0 %1692
        %v1695 = vsel %vm870, %v1691, 0
        %v1698 = vsel %vm870, %v1693, 0
        %1700 = vmatprep.subr.bf16.mxu0 0
        %1701 = vmatpush1.bf16.xpose.msra.mxu0 0
        %1702 = vmatprep.subr.bf16.mxu0 0
        %1703 = vmatpush1.bf16.xpose.msra.mxu0 0
        %1704 = vmatprep.subr.bf16.mxu0 0
        %1705 = vmatpush1.bf16.xpose.msra.mxu0 0
        %1706 = vmatprep.subr.bf16.mxu0 0
        %1707 = vmatpush1.bf16.xpose.msra.mxu0 0
        %1708 = vmatprep.subr.bf16.mxu0 0
        %1709 = vmatpush1.bf16.xpose.msra.mxu0 0
        %1710 = vmatprep.subr.bf16.mxu0 0
        %1711 = vmatpush1.bf16.xpose.msra.mxu0 0
        %1712 = vmatprep.subr.bf16.mxu0 0
        %1713 = vmatpush1.bf16.xpose.msra.mxu0 0
        %1714 = vmatprep.subr.bf16.mxu0 0
        %1715 = vmatpush1.bf16.xpose.msra.mxu0 %v1698
        %1716 = vmatprep.subr.bf16.mxu0 0
        %1717 = vmatpush2.bf16.xpose.msra.mxu0 0
        %1718 = vmatprep.subr.bf16.mxu0 0
        %1719 = vmatpush2.bf16.xpose.msra.mxu0 0
        %1720 = vmatprep.subr.bf16.mxu0 0
        %1721 = vmatpush2.bf16.xpose.msra.mxu0 0
        %1722 = vmatprep.subr.bf16.mxu0 0
        %1723 = vmatpush2.bf16.xpose.msra.mxu0 0
        %1724 = vmatprep.subr.bf16.mxu0 0
        %1725 = vmatpush2.bf16.xpose.msra.mxu0 0
        %1726 = vmatprep.subr.bf16.mxu0 0
        %1727 = vmatpush2.bf16.xpose.msra.mxu0 0
        %1728 = vmatprep.subr.bf16.mxu0 0
        %1729 = vmatpush2.bf16.xpose.msra.mxu0 0
        %1730 = vmatprep.subr.bf16.mxu0 0
        %1731 = vmatpush2.bf16.xpose.msra.mxu0 0
        %1732 = vmatprep.mubr.bf16.mxu0 0
        %1733 = vmatmul.mubr.bf16.gmra.mxu0 %v1695
        %v1734 = vpop.f32.mrf.mxu0
        %v1735 = vadd.f32 0.0, %v1734
        %v1736 = vpop.f32.mrf.mxu0
        %v1737 = vpop.f32.mrf.mxu0
        %v1738 = vpop.f32.mrf.mxu0
        %1739 = vdwg.mxu0
        %v1740 = vmul.f32 %v1735, 0.17677669
        %v1741 = vadd.f32 %v1740, %v922
        %v1742 = vsel %vm925, %v1741, -inf
        %1743 = vmax.xlane.f32.xlu0 %v1742
        %v1744 = vpop.xlane.xlu0 %1743
        %v1745 = vsub.f32 %v1741, %v1744
        %v1746 = vmul.f32 %v1745, 1.442695
        %v1747 = vpow.pop %v1746
        %v1748 = vsel %vm925, %v1747, 0.0
        %1749 = vadd.xlane.f32.xlu0 %v1748
        %v1750 = vpop.xlane.xlu0 %1749
        %v1751 = vrcp.pop %v1750
        %v1752 = vmul.f32 %v1747, %v1751
        %v1753 = vpack.c.bf16 %v1752, %v1752
        %1755 = vrot.lane.b32.xlu0 %v1579, 96
        %v1756 = vpop.permute.xlu0 %1755
        %v1758 = vsel %vm925, %v1753, 0
        %v1761 = vsel %vm941, %v1756, 0
        %1763 = vmatprep.subr.bf16.mxu0 0
        %1764 = vmatpush1.bf16.msra.mxu0 0
        %1765 = vmatprep.subr.bf16.mxu0 0
        %1766 = vmatpush1.bf16.msra.mxu0 0
        %1767 = vmatprep.subr.bf16.mxu0 0
        %1768 = vmatpush1.bf16.msra.mxu0 0
        %1769 = vmatprep.subr.bf16.mxu0 0
        %1770 = vmatpush1.bf16.msra.mxu0 0
        %1771 = vmatprep.subr.bf16.mxu0 0
        %1772 = vmatpush1.bf16.msra.mxu0 0
        %1773 = vmatprep.subr.bf16.mxu0 0
        %1774 = vmatpush1.bf16.msra.mxu0 0
        %1775 = vmatprep.subr.bf16.mxu0 0
        %1776 = vmatpush1.bf16.msra.mxu0 0
        %1777 = vmatprep.subr.bf16.mxu0 0
        %1778 = vmatpush1.bf16.msra.mxu0 %v1761
        %1779 = vmatprep.subr.bf16.mxu0 0
        %1780 = vmatpush2.bf16.msra.mxu0 0
        %1781 = vmatprep.subr.bf16.mxu0 0
        %1782 = vmatpush2.bf16.msra.mxu0 0
        %1783 = vmatprep.subr.bf16.mxu0 0
        %1784 = vmatpush2.bf16.msra.mxu0 0
        %1785 = vmatprep.subr.bf16.mxu0 0
        %1786 = vmatpush2.bf16.msra.mxu0 0
        %1787 = vmatprep.subr.bf16.mxu0 0
        %1788 = vmatpush2.bf16.msra.mxu0 0
        %1789 = vmatprep.subr.bf16.mxu0 0
        %1790 = vmatpush2.bf16.msra.mxu0 0
        %1791 = vmatprep.subr.bf16.mxu0 0
        %1792 = vmatpush2.bf16.msra.mxu0 0
        %1793 = vmatprep.subr.bf16.mxu0 0
        %1794 = vmatpush2.bf16.msra.mxu0 0
        %1795 = vmatprep.mubr.bf16.mxu0 0
        %1796 = vmatmul.mubr.bf16.gmra.mxu0 %v1758
        %v1797 = vpop.f32.mrf.mxu0
        %v1798 = vadd.f32 0.0, %v1797
        %v1799 = vpop.f32.mrf.mxu0
        %v1800 = vpop.f32.mrf.mxu0
        %v1801 = vpop.f32.mrf.mxu0
        %1802 = vdwg.mxu0
        %1804 = vrot.lane.b32.xlu0 %v1798, 32
        %v1805 = vpop.permute.xlu0 %1804
        %1807 = vst.msk [vmem:[#allocation2] sm:$0xff] %vm1103, %v1805
        %v1808 = vld [vmem:[#allocation2] sm:$0xff]
        %v1809 = vpack.c.bf16 %v1808, %v1808
        %s1810 = scalar_lea.vmem %s8, 32
        %v1811 = vld [vmem:[%s1810] sm:$0xf]
        %v1812 = vld [vmem:[%s1810 + $0x4] sm:$0xf]
        %v1813 = vld [vmem:[%s1810 + $0x8] sm:$0xf]
        %v1814 = vld [vmem:[%s1810 + $0xc] sm:$0xf]
        %v1815 = vld [vmem:[%s1810 + $0x10] sm:$0xf]
        %v1816 = vld [vmem:[%s1810 + $0x14] sm:$0xf]
        %v1817 = vld [vmem:[%s1810 + $0x18] sm:$0xf]
        %v1818 = vld [vmem:[%s1810 + $0x1c] sm:$0xf]
        %s1819 = scalar_lea.vmem %s9, 1
        %v1820 = vld [vmem:[%s1819] sm:$0x1]
        %v1822 = vlaneseq
        %v1823 = vshrl.u32 %v1822, 7
        %v1824 = vsub.s32 0, %v1823
        %v1825 = vrot.slane %v1820, %v1824
        %v1835 = vunpack.c.l.b16 %v1811
        %v1836 = vunpack.c.l.b16 %v1812
        %v1837 = vunpack.c.l.b16 %v1813
        %v1838 = vunpack.c.l.b16 %v1814
        %v1839 = vunpack.c.l.b16 %v1815
        %v1840 = vunpack.c.l.b16 %v1816
        %v1841 = vunpack.c.l.b16 %v1817
        %v1842 = vunpack.c.l.b16 %v1818
        %v1843 = vpack.c.b16 %v1836, %v1835
        %v1844 = vpack.c.b16 %v1838, %v1837
        %v1845 = vpack.c.b16 %v1840, %v1839
        %v1846 = vpack.c.b16 %v1842, %v1841
        %v1852 = vsel %vm683, %v1809, 0
        %1854 = vmatprep.subr.bf16.mxu0 0
        %1855 = vmatpush1.bf16.msra.mxu0 0
        %1856 = vmatprep.subr.bf16.mxu0 0
        %1857 = vmatpush1.bf16.msra.mxu0 0
        %1858 = vmatprep.subr.bf16.mxu0 0
        %1859 = vmatpush1.bf16.msra.mxu0 0
        %1860 = vmatprep.subr.bf16.mxu0 0
        %1861 = vmatpush1.bf16.msra.mxu0 0
        %1862 = vmatprep.subr.bf16.mxu0 0
        %1863 = vmatpush1.bf16.msra.mxu0 %v1846
        %1864 = vmatprep.subr.bf16.mxu0 0
        %1865 = vmatpush1.bf16.msra.mxu0 %v1845
        %1866 = vmatprep.subr.bf16.mxu0 0
        %1867 = vmatpush1.bf16.msra.mxu0 %v1844
        %1868 = vmatprep.subr.bf16.mxu0 0
        %1869 = vmatpush1.bf16.msra.mxu0 %v1843
        %1870 = vmatprep.subr.bf16.mxu0 0
        %1871 = vmatpush2.bf16.msra.mxu0 0
        %1872 = vmatprep.subr.bf16.mxu0 0
        %1873 = vmatpush2.bf16.msra.mxu0 0
        %1874 = vmatprep.subr.bf16.mxu0 0
        %1875 = vmatpush2.bf16.msra.mxu0 0
        %1876 = vmatprep.subr.bf16.mxu0 0
        %1877 = vmatpush2.bf16.msra.mxu0 0
        %1878 = vmatprep.subr.bf16.mxu0 0
        %1879 = vmatpush2.bf16.msra.mxu0 0
        %1880 = vmatprep.subr.bf16.mxu0 0
        %1881 = vmatpush2.bf16.msra.mxu0 0
        %1882 = vmatprep.subr.bf16.mxu0 0
        %1883 = vmatpush2.bf16.msra.mxu0 0
        %1884 = vmatprep.subr.bf16.mxu0 0
        %1885 = vmatpush2.bf16.msra.mxu0 0
        %1886 = vmatprep.mubr.bf16.mxu0 0
        %1887 = vmatmul.mubr.bf16.gmra.mxu0 %v1852
        %v1888 = vpop.f32.mrf.mxu0
        %v1889 = vadd.f32 %v1825, %v1888
        %v1890 = vpop.f32.mrf.mxu0
        %v1891 = vpop.f32.mrf.mxu0
        %v1892 = vpop.f32.mrf.mxu0
        %1893 = vdwg.mxu0
        %v1894 = vadd.f32 %v1470, %v1889
        %s1895 = scalar_lea.vmem %s10, 1
        %v1896 = vld [vmem:[%s1895] sm:$0x1]
        %s1897 = scalar_lea.vmem %s11, 1
        %v1898 = vld [vmem:[%s1897] sm:$0x1]
        %v1899 = vsel %vm683, %v1894, 0.0
        %1900 = vadd.xlane.f32.xlu0 %v1899
        %v1901 = vpop.xlane.xlu0 %1900
        %v1902 = vmul.f32 %v1901, %v732
        %v1903 = vsub.f32 %v1894, %v1902
        %v1904 = vmul.f32 %v1903, %v1903
        %v1905 = vsel %vm683, %v1904, 0.0
        %1906 = vadd.xlane.f32.xlu0 %v1905
        %v1907 = vpop.xlane.xlu0 %1906
        %v1908 = vmul.f32 %v1907, %v732
        %v1909 = vadd.f32 %v1908, 1e-12
        %v1910 = vrsqrt.pop %v1909
        %v1911 = vmul.f32 %v1903, %v1910
        %v1913 = vlaneseq
        %v1914 = vshrl.u32 %v1913, 7
        %v1915 = vsub.s32 0, %v1914
        %v1916 = vrot.slane %v1896, %v1915
        %v1918 = vmul.f32 %v1911, %v1916
        %v1920 = vlaneseq
        %v1921 = vshrl.u32 %v1920, 7
        %v1922 = vsub.s32 0, %v1921
        %v1923 = vrot.slane %v1898, %v1922
        %v1925 = vadd.f32 %v1918, %v1923
        %v1926 = vpack.c.bf16 %v1925, %v1925
        %s1927 = scalar_lea.vmem [#allocation8], 32
        %v1928 = vld [vmem:[%s1927] sm:$0xf]
        %v1929 = vld [vmem:[%s1927 + $0x4] sm:$0xf]
        %v1930 = vld [vmem:[%s1927 + $0x8] sm:$0xf]
        %v1931 = vld [vmem:[%s1927 + $0xc] sm:$0xf]
        %v1932 = vld [vmem:[%s1927 + $0x10] sm:$0xf]
        %v1933 = vld [vmem:[%s1927 + $0x14] sm:$0xf]
        %v1934 = vld [vmem:[%s1927 + $0x18] sm:$0xf]
        %v1935 = vld [vmem:[%s1927 + $0x1c] sm:$0xf]
        %s1936 = scalar_lea.vmem %s13, 1
        %v1937 = vld [vmem:[%s1936] sm:$0x1]
        %v1939 = vlaneseq
        %v1940 = vshrl.u32 %v1939, 7
        %v1941 = vsub.s32 0, %v1940
        %v1942 = vrot.slane %v1937, %v1941
        %v1952 = vunpack.c.l.b16 %v1928
        %v1953 = vunpack.c.l.b16 %v1929
        %v1954 = vunpack.c.l.b16 %v1930
        %v1955 = vunpack.c.l.b16 %v1931
        %v1956 = vunpack.c.l.b16 %v1932
        %v1957 = vunpack.c.l.b16 %v1933
        %v1958 = vunpack.c.l.b16 %v1934
        %v1959 = vunpack.c.l.b16 %v1935
        %v1960 = vpack.c.b16 %v1953, %v1952
        %v1961 = vpack.c.b16 %v1955, %v1954
        %v1962 = vpack.c.b16 %v1957, %v1956
        %v1963 = vpack.c.b16 %v1959, %v1958
        %v1969 = vsel %vm683, %v1926, 0
        %1971 = vmatprep.subr.bf16.mxu0 0
        %1972 = vmatpush1.bf16.msra.mxu0 0
        %1973 = vmatprep.subr.bf16.mxu0 0
        %1974 = vmatpush1.bf16.msra.mxu0 0
        %1975 = vmatprep.subr.bf16.mxu0 0
        %1976 = vmatpush1.bf16.msra.mxu0 0
        %1977 = vmatprep.subr.bf16.mxu0 0
        %1978 = vmatpush1.bf16.msra.mxu0 0
        %1979 = vmatprep.subr.bf16.mxu0 0
        %1980 = vmatpush1.bf16.msra.mxu0 %v1963
        %1981 = vmatprep.subr.bf16.mxu0 0
        %1982 = vmatpush1.bf16.msra.mxu0 %v1962
        %1983 = vmatprep.subr.bf16.mxu0 0
        %1984 = vmatpush1.bf16.msra.mxu0 %v1961
        %1985 = vmatprep.subr.bf16.mxu0 0
        %1986 = vmatpush1.bf16.msra.mxu0 %v1960
        %1987 = vmatprep.subr.bf16.mxu0 0
        %1988 = vmatpush2.bf16.msra.mxu0 0
        %1989 = vmatprep.subr.bf16.mxu0 0
        %1990 = vmatpush2.bf16.msra.mxu0 0
        %1991 = vmatprep.subr.bf16.mxu0 0
        %1992 = vmatpush2.bf16.msra.mxu0 0
        %1993 = vmatprep.subr.bf16.mxu0 0
        %1994 = vmatpush2.bf16.msra.mxu0 0
        %1995 = vmatprep.subr.bf16.mxu0 0
        %1996 = vmatpush2.bf16.msra.mxu0 0
        %1997 = vmatprep.subr.bf16.mxu0 0
        %1998 = vmatpush2.bf16.msra.mxu0 0
        %1999 = vmatprep.subr.bf16.mxu0 0
        %2000 = vmatpush2.bf16.msra.mxu0 0
        %2001 = vmatprep.subr.bf16.mxu0 0
        %2002 = vmatpush2.bf16.msra.mxu0 0
        %2003 = vmatprep.mubr.bf16.mxu0 0
        %2004 = vmatmul.mubr.bf16.gmra.mxu0 %v1969
        %v2005 = vpop.f32.mrf.mxu0
        %v2006 = vadd.f32 %v1942, %v2005
        %v2007 = vpop.f32.mrf.mxu0
        %v2008 = vpop.f32.mrf.mxu0
        %v2009 = vpop.f32.mrf.mxu0
        %2010 = vdwg.mxu0
        %v2011 = vmul.f32 %v2006, 0.70710677
        %v2012 = vand.u32 2147483647, %v2011
        %v2013 = vmul.f32 %v2012, 0.3275911
        %v2014 = vadd.f32 %v2013, 1.0
        %v2015 = vrcp.pop %v2014
        %v2016 = vmul.f32 1.0, %v2015
        %v2017 = vmul.f32 %v2016, 1.0614054
        %v2018 = vsub.f32 %v2017, 1.4531521
        %v2019 = vmul.f32 %v2018, %v2016
        %v2020 = vadd.f32 %v2019, 1.4214138
        %v2021 = vmul.f32 %v2020, %v2016
        %v2022 = vsub.f32 %v2021, 0.28449672
        %v2023 = vmul.f32 %v2022, %v2016
        %v2024 = vadd.f32 %v2023, 0.2548296
        %v2025 = vmul.f32 %v2024, %v2016
        %v2026 = vsub.f32 0.0, %v2012
        %v2027 = vmul.f32 %v2026, %v2012
        %v2028 = vmul.f32 %v2027, 1.442695
        %v2029 = vpow.pop %v2028
        %v2030 = vmul.f32 %v2025, %v2029
        %v2031 = vsub.f32 1.0, %v2030
        %vm2032 = vcmp.ge.f32.partialorder %v2011, 0.0
        %v2033 = vsub.f32 0.0, %v2031
        %v2034 = vsel %vm2032, %v2031, %v2033
        %v2035 = vmul.f32 %v2006, 0.5
        %v2036 = vadd.f32 %v2034, 1.0
        %v2037 = vmul.f32 %v2035, %v2036
        %v2038 = vpack.c.bf16 %v2037, %v2037
        %s2039 = scalar_lea.vmem %s14, 64
        %v2040 = vld [vmem:[%s2039] sm:$0xf]
        %v2041 = vld [vmem:[%s2039 + $0x4] sm:$0xf]
        %v2042 = vld [vmem:[%s2039 + $0x8] sm:$0xf]
        %v2043 = vld [vmem:[%s2039 + $0xc] sm:$0xf]
        %v2044 = vld [vmem:[%s2039 + $0x10] sm:$0xf]
        %v2045 = vld [vmem:[%s2039 + $0x14] sm:$0xf]
        %v2046 = vld [vmem:[%s2039 + $0x18] sm:$0xf]
        %v2047 = vld [vmem:[%s2039 + $0x1c] sm:$0xf]
        %v2048 = vld [vmem:[%s2039 + $0x20] sm:$0xf]
        %v2049 = vld [vmem:[%s2039 + $0x24] sm:$0xf]
        %v2050 = vld [vmem:[%s2039 + $0x28] sm:$0xf]
        %v2051 = vld [vmem:[%s2039 + $0x2c] sm:$0xf]
        %v2052 = vld [vmem:[%s2039 + $0x30] sm:$0xf]
        %v2053 = vld [vmem:[%s2039 + $0x34] sm:$0xf]
        %v2054 = vld [vmem:[%s2039 + $0x38] sm:$0xf]
        %v2055 = vld [vmem:[%s2039 + $0x3c] sm:$0xf]
        %s2056 = scalar_lea.vmem %s15, 1
        %v2057 = vld [vmem:[%s2056] sm:$0x1]
        %v2059 = vlaneseq
        %v2060 = vshrl.u32 %v2059, 7
        %v2061 = vsub.s32 0, %v2060
        %v2062 = vrot.slane %v2057, %v2061
        %v2080 = vunpack.c.l.b16 %v2040
        %v2081 = vunpack.c.l.b16 %v2041
        %v2082 = vunpack.c.l.b16 %v2042
        %v2083 = vunpack.c.l.b16 %v2043
        %v2084 = vunpack.c.l.b16 %v2044
        %v2085 = vunpack.c.l.b16 %v2045
        %v2086 = vunpack.c.l.b16 %v2046
        %v2087 = vunpack.c.l.b16 %v2047
        %v2088 = vunpack.c.l.b16 %v2048
        %v2089 = vunpack.c.l.b16 %v2049
        %v2090 = vunpack.c.l.b16 %v2050
        %v2091 = vunpack.c.l.b16 %v2051
        %v2092 = vunpack.c.l.b16 %v2052
        %v2093 = vunpack.c.l.b16 %v2053
        %v2094 = vunpack.c.l.b16 %v2054
        %v2095 = vunpack.c.l.b16 %v2055
        %v2096 = vpack.c.b16 %v2081, %v2080
        %v2097 = vpack.c.b16 %v2083, %v2082
        %v2098 = vpack.c.b16 %v2085, %v2084
        %v2099 = vpack.c.b16 %v2087, %v2086
        %v2100 = vpack.c.b16 %v2089, %v2088
        %v2101 = vpack.c.b16 %v2091, %v2090
        %v2102 = vpack.c.b16 %v2093, %v2092
        %v2103 = vpack.c.b16 %v2095, %v2094
        %2112 = vmatprep.subr.bf16.mxu0 0
        %2113 = vmatpush1.bf16.msra.mxu0 %v2103
        %2114 = vmatprep.subr.bf16.mxu0 0
        %2115 = vmatpush1.bf16.msra.mxu0 %v2102
        %2116 = vmatprep.subr.bf16.mxu0 0
        %2117 = vmatpush1.bf16.msra.mxu0 %v2101
        %2118 = vmatprep.subr.bf16.mxu0 0
        %2119 = vmatpush1.bf16.msra.mxu0 %v2100
        %2120 = vmatprep.subr.bf16.mxu0 0
        %2121 = vmatpush1.bf16.msra.mxu0 %v2099
        %2122 = vmatprep.subr.bf16.mxu0 0
        %2123 = vmatpush1.bf16.msra.mxu0 %v2098
        %2124 = vmatprep.subr.bf16.mxu0 0
        %2125 = vmatpush1.bf16.msra.mxu0 %v2097
        %2126 = vmatprep.subr.bf16.mxu0 0
        %2127 = vmatpush1.bf16.msra.mxu0 %v2096
        %2128 = vmatprep.subr.bf16.mxu0 0
        %2129 = vmatpush2.bf16.msra.mxu0 0
        %2130 = vmatprep.subr.bf16.mxu0 0
        %2131 = vmatpush2.bf16.msra.mxu0 0
        %2132 = vmatprep.subr.bf16.mxu0 0
        %2133 = vmatpush2.bf16.msra.mxu0 0
        %2134 = vmatprep.subr.bf16.mxu0 0
        %2135 = vmatpush2.bf16.msra.mxu0 0
        %2136 = vmatprep.subr.bf16.mxu0 0
        %2137 = vmatpush2.bf16.msra.mxu0 0
        %2138 = vmatprep.subr.bf16.mxu0 0
        %2139 = vmatpush2.bf16.msra.mxu0 0
        %2140 = vmatprep.subr.bf16.mxu0 0
        %2141 = vmatpush2.bf16.msra.mxu0 0
        %2142 = vmatprep.subr.bf16.mxu0 0
        %2143 = vmatpush2.bf16.msra.mxu0 0
        %2144 = vmatprep.mubr.bf16.mxu0 0
        %2145 = vmatmul.mubr.bf16.gmra.mxu0 %v2038
        %v2146 = vpop.f32.mrf.mxu0
        %v2147 = vadd.f32 %v2062, %v2146
        %v2148 = vpop.f32.mrf.mxu0
        %v2149 = vpop.f32.mrf.mxu0
        %v2150 = vpop.f32.mrf.mxu0
        %2151 = vdwg.mxu0
        %v2152 = vadd.f32 %v1925, %v2147
        %s2153 = scalar_lea.vmem %s16, 1
        %v2154 = vld [vmem:[%s2153] sm:$0x1]
        %s2155 = scalar_lea.vmem [#allocation9], 1
        %v2156 = vld [vmem:[%s2155] sm:$0x1]
        %v2157 = vsel %vm683, %v2152, 0.0
        %2158 = vadd.xlane.f32.xlu0 %v2157
        %v2159 = vpop.xlane.xlu0 %2158
        %v2160 = vmul.f32 %v2159, %v732
        %v2161 = vsub.f32 %v2152, %v2160
        %v2162 = vmul.f32 %v2161, %v2161
        %v2163 = vsel %vm683, %v2162, 0.0
        %2164 = vadd.xlane.f32.xlu0 %v2163
        %v2165 = vpop.xlane.xlu0 %2164
        %v2166 = vmul.f32 %v2165, %v732
        %v2167 = vadd.f32 %v2166, 1e-12
        %v2168 = vrsqrt.pop %v2167
        %v2169 = vmul.f32 %v2161, %v2168
        %v2171 = vlaneseq
        %v2172 = vshrl.u32 %v2171, 7
        %v2173 = vsub.s32 0, %v2172
        %v2174 = vrot.slane %v2154, %v2173
        %v2176 = vmul.f32 %v2169, %v2174
        %v2178 = vlaneseq
        %v2179 = vshrl.u32 %v2178, 7
        %v2180 = vsub.s32 0, %v2179
        %v2181 = vrot.slane %v2156, %v2180
        %v2183 = vadd.f32 %v2176, %v2181
        %vm2184 = vcmask 516096
        %2185 = vst.msk [vmem:[%s631] sm:$0x1] %vm2184, %v2183
        %s2186 = sand.u32 %s431, 1
        %s2187 = scalar_lea.sflag [#allocation5], %s2186
        %s2188 = sand.u32 %s431, 1
        %s2189 = scalar_lea.vmem [#allocation11], %s2188
        // Predicated region
        $region109: #{text_encoder_forward.1} parent=91 // pred_check
          %p2190 = pneg %p441
        $region110: #{text_encoder_forward.1} parent=91 // pred_check_branch
          %2192 = sbr.rel (%p2190) target = $region112
        $region111: #{text_encoder_forward.1} parent=91 // pred_region
          %s2194 = ssub.s32 16, 16
          %2195 = vsyncadd %s2187, %s2194
          %s2196 = smul.addr %s35, 16
          %s2197 = scalar_lea.hbm %s18, %s2196
          %s2199 = sshll.u32 %s2189, 4
          %s2200 = int_to_ptr.vmem [resolvable:$true] %s2199
          %2202 = dma.vmem_to_hbm [thread:$0]  %s2200, 16, %s2197, %s2187
        $region112: #{text_encoder_forward.1} parent=91 // pred_fallthru
          _
      $region92: #{text_encoder_forward.1} parent=5 // pred_fallthru
        _
      %p2203 = scmp.le.s32.totalorder 2, %s30
      // Predicated region
      $region113: #{text_encoder_forward.1} parent=5 // pred_check
        %p2204 = pneg %p2203
      $region114: #{text_encoder_forward.1} parent=5 // pred_check_branch
        %2206 = sbr.rel (%p2204) target = $region116
      $region115: #{text_encoder_forward.1} parent=5 // pred_region
        %s2207 = ssub.s32 %s30, 2
        // Predicated region
        $region117: #{text_encoder_forward.1} parent=115 // pred_check
          %p2208 = pneg %p447
        $region118: #{text_encoder_forward.1} parent=115 // pred_check_branch
          %2210 = sbr.rel (%p2208) target = $region120
        $region119: #{text_encoder_forward.1} parent=115 // pred_region
          %s2211 = sand.u32 %s432, 1
          %s2212 = scalar_lea.sflag [#allocation5], %s2211
          %s2213 = sand.u32 %s432, 1
          %s2214 = scalar_lea.vmem [#allocation11], %s2213
          %2215 = dma.done %s2212, 16
        $region120: #{text_encoder_forward.1} parent=115 // pred_fallthru
          _
      $region116: #{text_encoder_forward.1} parent=5 // pred_fallthru
        _
    $region6: #{text_encoder_forward.1} parent=1 // loop_footer
      %s34 = sadd.s32 1, %s30
    $region7: #{text_encoder_forward.1} parent=1 // loop_footer_branch
      %29 = sbr.rel target = $region3
    $region8: #{text_encoder_forward.1} parent=1 // loop_exit
      _
    %2216 = vsyncpa [#allocation4], 1
    %s2217 = scalar_lea.sflag [#allocation4], 1
    %2218 = vsyncpa %s2217, 1
    %2219 = vsyncpa [#allocation7], 1
    %2220 = vsyncpa [#allocation10], 1
    %2221 = vsyncpa [#allocation5], 1
    %s2222 = scalar_lea.sflag [#allocation5], 1
    %2223 = vsyncpa %s2222, 1

</llo_original>
